<compile_context>
chip_gen: v7x
topology: tpu7x:2x2x1
jax: 0.10.0
libtpu: 0.0.40
codegen_flags: <defaults>
</compile_context>

<pallas_src>
import functools

import numpy as np
import jax
import jax.numpy as jnp
from jax.experimental import pallas as pl
from jax.experimental.pallas import tpu as pltpu

# Module constants (mirror nn.Conv2d(1, 20, 5) -> nn.Conv2d(20, 20, 5)).
K = 5            # kernel size (both convs)
C_IN = 1         # conv1 input channels
C1 = 20          # conv1 output channels
C2 = 20          # conv2 output channels
LANES = 128      # lane-dense width used for all matmul operands / outputs
TAPS1 = K * K    # 25 conv1 taps
assert K * TAPS1 <= LANES  # 125 im2col lanes fit in 128


def _round_up(x, m):
    return (x + m - 1) // m * m


def _fused_kernel(x_ref, w1_ref, b1_ref, w2_ref, b2_ref, o_ref, h1_ref, *,
                  n_batch, w_img, r1, r2):
    """relu(conv2(relu(conv1(x)))) for the whole batch in one grid step.

    x_ref : (n*r1, 128)   im2col'd input (25 conv1 taps x 5 dj shifts, pad 128)
    w1_ref: (128, 128)    block-diagonal conv1 weights (dj-replicated)
    b1_ref: (1, 128)      conv1 bias tiled over the 5 dj blocks
    w2_ref: (K, 128, 128) conv2 weights, per vertical tap di, dj-packed rows
    b2_ref: (1, 128)      conv2 bias (Cout padded to 128)
    o_ref : (n*r2, 128)   lane-dense conv2 output slab
    h1_ref: (n*r1, 128)   VMEM scratch for the dj-packed conv1 activation
    """
    f32 = jnp.float32

    # ---- conv1 + ReLU: one 128-deep matmul, strip-mined over 128-row chunks
    # (batch folded into M; keeps live values well inside the 64-vreg file). ----
    w1 = w1_ref[...]
    b1 = b1_ref[...]
    rows = n_batch * r1
    chunk = 128
    r0 = 0
    while r0 < rows:
        rc = min(chunk, rows - r0)
        h1_ref[r0:r0 + rc, :] = jnp.maximum(
            jnp.dot(x_ref[r0:r0 + rc, :], w1, preferred_element_type=f32) + b1,
            0.0)
        r0 += rc

    # ---- conv2 + ReLU: 5 vertical taps per image, each a (r2,128)@(128,128)
    # matmul; every h1 slice starts at base + di*w_img (sublane-aligned when
    # w_img % 8 == 0), so there is no XLU shift work at all. ----
    b2 = b2_ref[...]
    for b in range(n_batch):
        base = b * r1
        acc = jnp.dot(h1_ref[base:base + r2, :], w2_ref[0],
                      preferred_element_type=f32)
        for di in range(1, K):
            off = base + di * w_img
            acc = acc + jnp.dot(h1_ref[off:off + r2, :], w2_ref[di],
                                preferred_element_type=f32)
        o_ref[b * r2:(b + 1) * r2, :] = jnp.maximum(acc + b2, 0.0).astype(
            o_ref.dtype)


def model_forward(x_nchw, kparams):
    """Fused Pallas forward: relu(conv2(relu(conv1(x)))). Input/output NCHW."""
    w1k, b1k, w2k, b2k = kparams
    n, cin, h, w = x_nchw.shape
    assert cin == C_IN
    oh1, ow1 = h - K + 1, w - K + 1          # conv1 output spatial (12, 12)
    oh2, ow2 = oh1 - K + 1, ow1 - K + 1      # conv2 output spatial (8, 8)

    r2 = oh2 * w                             # conv2 rows per image (incl. garbage cols)
    r1 = _round_up(r2 + (K - 1) * w, 8)      # h1 rows reachable by conv2's di taps
    max_off = (K - 1) * (w + 2)              # max im2col flat offset (dj + di1*w + dj1)
    pad_len = r1 + max_off                   # padded flat-input length per image

    # --- wrapper im2col (single gather): lane l = dj*25 + di1*5 + dj1 reads
    # x_flat[row + dj + di1*w + dj1]; lanes 125..127 read offset 0 and are
    # multiplied by zero weight columns in the kernel. ---
    offs = np.zeros((LANES,), np.int32)
    for dj in range(K):
        for di1 in range(K):
            for dj1 in range(K):
                offs[dj * TAPS1 + di1 * K + dj1] = dj + di1 * w + dj1
    row_idx = np.arange(r1, dtype=np.int32)[:, None] + offs[None, :]   # (r1, 128)

    x_flat = x_nchw.astype(jnp.float32).reshape(n, h * w)          # Cin == 1
    x_flat = jnp.pad(x_flat, ((0, 0), (0, pad_len - h * w)))
    x2d = x_flat[:, row_idx].reshape(n * r1, LANES)                # (n*r1, 128)

    kernel = functools.partial(_fused_kernel, n_batch=n, w_img=w, r1=r1, r2=r2)
    out2d = pl.pallas_call(
        kernel,
        out_shape=jax.ShapeDtypeStruct((n * r2, LANES), jnp.float32),
        grid=(1,),                                   # single step: batch folded into M
        in_specs=[
            pl.BlockSpec((n * r1, LANES), lambda i: (0, 0)),
            pl.BlockSpec((LANES, LANES), lambda i: (0, 0)),
            pl.BlockSpec((1, LANES), lambda i: (0, 0)),
            pl.BlockSpec((K, LANES, LANES), lambda i: (0, 0, 0)),
            pl.BlockSpec((1, LANES), lambda i: (0, 0)),
        ],
        out_specs=pl.BlockSpec((n * r2, LANES), lambda i: (0, 0)),
        scratch_shapes=[pltpu.VMEM((n * r1, LANES), jnp.float32)],
        compiler_params=pltpu.CompilerParams(
            dimension_semantics=("arbitrary",)),
    )(x2d, w1k, b1k, w2k, b2k)

    # (n*r2, 128): keep only valid width columns and the real 20 channels.
    out = out2d.reshape(n, oh2, w, LANES)[:, :, :ow2, :C2]
    return jnp.transpose(out, (0, 3, 1, 2))          # NHWC -> NCHW


def init_params(key):
    """Deterministic synthetic parameters in PyTorch OIHW layout."""
    k1, k2, k3, k4 = jax.random.split(key, 4)
    w1 = jax.random.normal(k1, (C1, C_IN, K, K), jnp.float32) * 0.1
    b1 = jax.random.normal(k2, (C1,), jnp.float32) * 0.1
    w2 = jax.random.normal(k3, (C2, C1, K, K), jnp.float32) * 0.05
    b2 = jax.random.normal(k4, (C2,), jnp.float32) * 0.1
    return w1, b1, w2, b2


def prep_params(params):
    """One-time packing of OIHW params into the kernel layout (hoisted)."""
    w1, b1, w2, b2 = params
    # conv1: block-diagonal over conv2's 5 dj shifts.
    #   W1[dj*25 + di1*5 + dj1, dj*20 + c] = w1[c, 0, di1, dj1]
    w1_tap = jnp.transpose(w1, (2, 3, 1, 0)).reshape(TAPS1, C1)    # (25, 20)
    w1k = jnp.zeros((LANES, LANES), jnp.float32)
    for dj in range(K):
        w1k = w1k.at[dj * TAPS1:(dj + 1) * TAPS1,
                     dj * C1:(dj + 1) * C1].set(w1_tap)
    b1k = jnp.pad(jnp.tile(b1.reshape(1, C1), (1, K)),
                  ((0, 0), (0, LANES - K * C1))).astype(jnp.float32)
    # conv2: per vertical tap di, dj-packed rows, Cout padded to 128.
    #   W2[di, dj*20 + cin, cout] = w2[cout, cin, di, dj]
    w2_t = jnp.transpose(w2, (2, 3, 1, 0)).reshape(K, K * C1, C2)  # (5, 100, 20)
    w2k = jnp.pad(w2_t, ((0, 0), (0, LANES - K * C1),
                         (0, LANES - C2))).astype(jnp.float32)
    b2k = jnp.pad(b2.reshape(1, C2),
                  ((0, 0), (0, LANES - C2))).astype(jnp.float32)
    return w1k, b1k, w2k, b2k


def reference_forward(x_nchw, params):
    """Pure-JAX reference (lax conv) for correctness checking."""
    w1, b1, w2, b2 = params
    dn = ("NHWC", "HWIO", "NHWC")
    x = jnp.transpose(x_nchw, (0, 2, 3, 1)).astype(jnp.float32)
    w1h = jnp.transpose(w1, (2, 3, 1, 0))
    w2h = jnp.transpose(w2, (2, 3, 1, 0))
    h = jax.nn.relu(
        jax.lax.conv_general_dilated(x, w1h, (1, 1), "VALID",
                                     dimension_numbers=dn) + b1)
    h = jax.nn.relu(
        jax.lax.conv_general_dilated(h, w2h, (1, 1), "VALID",
                                     dimension_numbers=dn) + b2)
    return jnp.transpose(h, (0, 3, 1, 2))


if __name__ == "__main__":
    key = jax.random.PRNGKey(0)
    kx, kp = jax.random.split(key)
    # Small NCHW input consistent with Conv2d(1, 20, 5): (batch=2, C=1, 16, 16)
    x = jax.random.normal(kx, (2, C_IN, 16, 16), jnp.float32)
    params = init_params(kp)
    kparams = prep_params(params)

    fwd = jax.jit(model_forward)
    out = jax.block_until_ready(fwd(x, kparams))
    ref = jax.block_until_ready(reference_forward(x, params))

    assert out.shape == (2, C2, 8, 8), out.shape
    err = float(jnp.max(jnp.abs(out - ref)))
    assert jnp.allclose(out, ref, atol=1e-4, rtol=1e-4), (
        f"mismatch vs lax reference: max abs err {err}")
    print("KERNEL_OK")
</pallas_src>

<mosaic_0001>
module attributes {stable_mosaic.version = 11 : i64} {
  func.func @_fused_kernel(%arg0: i32, %arg1: memref<384x128xf32, #tpu.memory_space<vmem>>, %arg2: memref<128x128xf32, #tpu.memory_space<vmem>>, %arg3: memref<1x128xf32, #tpu.memory_space<vmem>>, %arg4: memref<5x128x128xf32, #tpu.memory_space<vmem>>, %arg5: memref<1x128xf32, #tpu.memory_space<vmem>>, %arg6: memref<256x128xf32, #tpu.memory_space<vmem>>, %arg7: memref<384x128xf32, #tpu.memory_space<vmem>>) attributes {dimension_semantics = [#tpu.dimension_semantics<arbitrary>], iteration_bounds = array<i64: 1>, scalar_prefetch = 0 : i64, scratch_operands = 1 : i64, tpu.core_type = #tpu.core_type<tc>, window_params = [{pipeline_mode = #tpu.pipeline_mode<synchronous>, transform_indices = @transform_0, window_bounds = array<i64: 384, 128>}, {pipeline_mode = #tpu.pipeline_mode<synchronous>, transform_indices = @transform_1, window_bounds = array<i64: 128, 128>}, {pipeline_mode = #tpu.pipeline_mode<synchronous>, transform_indices = @transform_2, window_bounds = array<i64: 1, 128>}, {pipeline_mode = #tpu.pipeline_mode<synchronous>, transform_indices = @transform_3, window_bounds = array<i64: 5, 128, 128>}, {pipeline_mode = #tpu.pipeline_mode<synchronous>, transform_indices = @transform_4, window_bounds = array<i64: 1, 128>}, {pipeline_mode = #tpu.pipeline_mode<synchronous>, transform_indices = @transform_5, window_bounds = array<i64: 256, 128>}]} {
    %c0 = arith.constant 0 : index
    %c0_0 = arith.constant 0 : index
    %0 = vector.load %arg2[%c0, %c0_0] : memref<128x128xf32, #tpu.memory_space<vmem>>, vector<128x128xf32>
    %c0_1 = arith.constant 0 : index
    %c0_2 = arith.constant 0 : index
    %1 = vector.load %arg3[%c0_1, %c0_2] : memref<1x128xf32, #tpu.memory_space<vmem>>, vector<1x128xf32>
    %c0_3 = arith.constant 0 : index
    %c0_4 = arith.constant 0 : index
    %2 = vector.load %arg1[%c0_3, %c0_4] : memref<384x128xf32, #tpu.memory_space<vmem>>, vector<128x128xf32>
    %cst = arith.constant dense<0.000000e+00> : vector<128x128xf32>
    %3 = tpu.matmul %2, %0, %cst {dimension_numbers = #tpu.dot_dimension_numbers<[1], [0], [0], [1], [0, 0, 1, 1], [], []>} : vector<128x128xf32>, vector<128x128xf32>, vector<128x128xf32> -> vector<128x128xf32>
    %4 = vector.broadcast %1 : vector<1x128xf32> to vector<128x128xf32>
    %5 = arith.addf %3, %4 : vector<128x128xf32>
    %cst_5 = arith.constant 0.000000e+00 : f32
    %6 = vector.broadcast %cst_5 : f32 to vector<128x128xf32>
    %7 = arith.maximumf %5, %6 : vector<128x128xf32>
    %c0_6 = arith.constant 0 : index
    %c0_7 = arith.constant 0 : index
    %8 = vector.load %arg7[%c0_6, %c0_7] : memref<384x128xf32, #tpu.memory_space<vmem>>, vector<128x128xf32>
    tpu.vector_store %arg7[%c0_6, %c0_7], %7 {strides = array<i32>} : memref<384x128xf32, #tpu.memory_space<vmem>>, vector<128x128xf32>,
    %c128 = arith.constant 128 : index
    %c0_8 = arith.constant 0 : index
    %9 = vector.load %arg1[%c128, %c0_8] : memref<384x128xf32, #tpu.memory_space<vmem>>, vector<128x128xf32>
    %cst_9 = arith.constant dense<0.000000e+00> : vector<128x128xf32>
    %10 = tpu.matmul %9, %0, %cst_9 {dimension_numbers = #tpu.dot_dimension_numbers<[1], [0], [0], [1], [0, 0, 1, 1], [], []>} : vector<128x128xf32>, vector<128x128xf32>, vector<128x128xf32> -> vector<128x128xf32>
    %11 = vector.broadcast %1 : vector<1x128xf32> to vector<128x128xf32>
    %12 = arith.addf %10, %11 : vector<128x128xf32>
    %cst_10 = arith.constant 0.000000e+00 : f32
    %13 = vector.broadcast %cst_10 : f32 to vector<128x128xf32>
    %14 = arith.maximumf %12, %13 : vector<128x128xf32>
    %c128_11 = arith.constant 128 : index
    %c0_12 = arith.constant 0 : index
    %15 = vector.load %arg7[%c128_11, %c0_12] : memref<384x128xf32, #tpu.memory_space<vmem>>, vector<128x128xf32>
    tpu.vector_store %arg7[%c128_11, %c0_12], %14 {strides = array<i32>} : memref<384x128xf32, #tpu.memory_space<vmem>>, vector<128x128xf32>,
    %c256 = arith.constant 256 : index
    %c0_13 = arith.constant 0 : index
    %16 = vector.load %arg1[%c256, %c0_13] : memref<384x128xf32, #tpu.memory_space<vmem>>, vector<128x128xf32>
    %cst_14 = arith.constant dense<0.000000e+00> : vector<128x128xf32>
    %17 = tpu.matmul %16, %0, %cst_14 {dimension_numbers = #tpu.dot_dimension_numbers<[1], [0], [0], [1], [0, 0, 1, 1], [], []>} : vector<128x128xf32>, vector<128x128xf32>, vector<128x128xf32> -> vector<128x128xf32>
    %18 = vector.broadcast %1 : vector<1x128xf32> to vector<128x128xf32>
    %19 = arith.addf %17, %18 : vector<128x128xf32>
    %cst_15 = arith.constant 0.000000e+00 : f32
    %20 = vector.broadcast %cst_15 : f32 to vector<128x128xf32>
    %21 = arith.maximumf %19, %20 : vector<128x128xf32>
    %c256_16 = arith.constant 256 : index
    %c0_17 = arith.constant 0 : index
    %22 = vector.load %arg7[%c256_16, %c0_17] : memref<384x128xf32, #tpu.memory_space<vmem>>, vector<128x128xf32>
    tpu.vector_store %arg7[%c256_16, %c0_17], %21 {strides = array<i32>} : memref<384x128xf32, #tpu.memory_space<vmem>>, vector<128x128xf32>,
    %c0_18 = arith.constant 0 : index
    %c0_19 = arith.constant 0 : index
    %23 = vector.load %arg5[%c0_18, %c0_19] : memref<1x128xf32, #tpu.memory_space<vmem>>, vector<1x128xf32>
    %c0_20 = arith.constant 0 : index
    %c0_21 = arith.constant 0 : index
    %24 = vector.load %arg7[%c0_20, %c0_21] : memref<384x128xf32, #tpu.memory_space<vmem>>, vector<128x128xf32>
    %c0_22 = arith.constant 0 : index
    %c0_23 = arith.constant 0 : index
    %c0_24 = arith.constant 0 : index
    %25 = vector.load %arg4[%c0_22, %c0_23, %c0_24] : memref<5x128x128xf32, #tpu.memory_space<vmem>>, vector<1x128x128xf32>
    %26 = vector.shape_cast %25 : vector<1x128x128xf32> to vector<128x128xf32>
    %cst_25 = arith.constant dense<0.000000e+00> : vector<128x128xf32>
    %27 = tpu.matmul %24, %26, %cst_25 {dimension_numbers = #tpu.dot_dimension_numbers<[1], [0], [0], [1], [0, 0, 1, 1], [], []>} : vector<128x128xf32>, vector<128x128xf32>, vector<128x128xf32> -> vector<128x128xf32>
    %c16 = arith.constant 16 : index
    %c0_26 = arith.constant 0 : index
    %28 = vector.load %arg7[%c16, %c0_26] : memref<384x128xf32, #tpu.memory_space<vmem>>, vector<128x128xf32>
    %c1 = arith.constant 1 : index
    %c0_27 = arith.constant 0 : index
    %c0_28 = arith.constant 0 : index
    %29 = vector.load %arg4[%c1, %c0_27, %c0_28] : memref<5x128x128xf32, #tpu.memory_space<vmem>>, vector<1x128x128xf32>
    %30 = vector.shape_cast %29 : vector<1x128x128xf32> to vector<128x128xf32>
    %cst_29 = arith.constant dense<0.000000e+00> : vector<128x128xf32>
    %31 = tpu.matmul %28, %30, %cst_29 {dimension_numbers = #tpu.dot_dimension_numbers<[1], [0], [0], [1], [0, 0, 1, 1], [], []>} : vector<128x128xf32>, vector<128x128xf32>, vector<128x128xf32> -> vector<128x128xf32>
    %32 = arith.addf %27, %31 : vector<128x128xf32>
    %c32 = arith.constant 32 : index
    %c0_30 = arith.constant 0 : index
    %33 = vector.load %arg7[%c32, %c0_30] : memref<384x128xf32, #tpu.memory_space<vmem>>, vector<128x128xf32>
    %c2 = arith.constant 2 : index
    %c0_31 = arith.constant 0 : index
    %c0_32 = arith.constant 0 : index
    %34 = vector.load %arg4[%c2, %c0_31, %c0_32] : memref<5x128x128xf32, #tpu.memory_space<vmem>>, vector<1x128x128xf32>
    %35 = vector.shape_cast %34 : vector<1x128x128xf32> to vector<128x128xf32>
    %cst_33 = arith.constant dense<0.000000e+00> : vector<128x128xf32>
    %36 = tpu.matmul %33, %35, %cst_33 {dimension_numbers = #tpu.dot_dimension_numbers<[1], [0], [0], [1], [0, 0, 1, 1], [], []>} : vector<128x128xf32>, vector<128x128xf32>, vector<128x128xf32> -> vector<128x128xf32>
    %37 = arith.addf %32, %36 : vector<128x128xf32>
    %c48 = arith.constant 48 : index
    %c0_34 = arith.constant 0 : index
    %38 = vector.load %arg7[%c48, %c0_34] : memref<384x128xf32, #tpu.memory_space<vmem>>, vector<128x128xf32>
    %c3 = arith.constant 3 : index
    %c0_35 = arith.constant 0 : index
    %c0_36 = arith.constant 0 : index
    %39 = vector.load %arg4[%c3, %c0_35, %c0_36] : memref<5x128x128xf32, #tpu.memory_space<vmem>>, vector<1x128x128xf32>
    %40 = vector.shape_cast %39 : vector<1x128x128xf32> to vector<128x128xf32>
    %cst_37 = arith.constant dense<0.000000e+00> : vector<128x128xf32>
    %41 = tpu.matmul %38, %40, %cst_37 {dimension_numbers = #tpu.dot_dimension_numbers<[1], [0], [0], [1], [0, 0, 1, 1], [], []>} : vector<128x128xf32>, vector<128x128xf32>, vector<128x128xf32> -> vector<128x128xf32>
    %42 = arith.addf %37, %41 : vector<128x128xf32>
    %c64 = arith.constant 64 : index
    %c0_38 = arith.constant 0 : index
    %43 = vector.load %arg7[%c64, %c0_38] : memref<384x128xf32, #tpu.memory_space<vmem>>, vector<128x128xf32>
    %c4 = arith.constant 4 : index
    %c0_39 = arith.constant 0 : index
    %c0_40 = arith.constant 0 : index
    %44 = vector.load %arg4[%c4, %c0_39, %c0_40] : memref<5x128x128xf32, #tpu.memory_space<vmem>>, vector<1x128x128xf32>
    %45 = vector.shape_cast %44 : vector<1x128x128xf32> to vector<128x128xf32>
    %cst_41 = arith.constant dense<0.000000e+00> : vector<128x128xf32>
    %46 = tpu.matmul %43, %45, %cst_41 {dimension_numbers = #tpu.dot_dimension_numbers<[1], [0], [0], [1], [0, 0, 1, 1], [], []>} : vector<128x128xf32>, vector<128x128xf32>, vector<128x128xf32> -> vector<128x128xf32>
    %47 = arith.addf %42, %46 : vector<128x128xf32>
    %48 = vector.broadcast %23 : vector<1x128xf32> to vector<128x128xf32>
    %49 = arith.addf %47, %48 : vector<128x128xf32>
    %cst_42 = arith.constant 0.000000e+00 : f32
    %50 = vector.broadcast %cst_42 : f32 to vector<128x128xf32>
    %51 = arith.maximumf %49, %50 : vector<128x128xf32>
    %c0_43 = arith.constant 0 : index
    %c0_44 = arith.constant 0 : index
    %52 = vector.load %arg6[%c0_43, %c0_44] : memref<256x128xf32, #tpu.memory_space<vmem>>, vector<128x128xf32>
    tpu.vector_store %arg6[%c0_43, %c0_44], %51 {strides = array<i32>} : memref<256x128xf32, #tpu.memory_space<vmem>>, vector<128x128xf32>,
    %c192 = arith.constant 192 : index
    %c0_45 = arith.constant 0 : index
    %53 = vector.load %arg7[%c192, %c0_45] : memref<384x128xf32, #tpu.memory_space<vmem>>, vector<128x128xf32>
    %c0_46 = arith.constant 0 : index
    %c0_47 = arith.constant 0 : index
    %c0_48 = arith.constant 0 : index
    %54 = vector.load %arg4[%c0_46, %c0_47, %c0_48] : memref<5x128x128xf32, #tpu.memory_space<vmem>>, vector<1x128x128xf32>
    %55 = vector.shape_cast %54 : vector<1x128x128xf32> to vector<128x128xf32>
    %cst_49 = arith.constant dense<0.000000e+00> : vector<128x128xf32>
    %56 = tpu.matmul %53, %55, %cst_49 {dimension_numbers = #tpu.dot_dimension_numbers<[1], [0], [0], [1], [0, 0, 1, 1], [], []>} : vector<128x128xf32>, vector<128x128xf32>, vector<128x128xf32> -> vector<128x128xf32>
    %c208 = arith.constant 208 : index
    %c0_50 = arith.constant 0 : index
    %57 = vector.load %arg7[%c208, %c0_50] : memref<384x128xf32, #tpu.memory_space<vmem>>, vector<128x128xf32>
    %c1_51 = arith.constant 1 : index
    %c0_52 = arith.constant 0 : index
    %c0_53 = arith.constant 0 : index
    %58 = vector.load %arg4[%c1_51, %c0_52, %c0_53] : memref<5x128x128xf32, #tpu.memory_space<vmem>>, vector<1x128x128xf32>
    %59 = vector.shape_cast %58 : vector<1x128x128xf32> to vector<128x128xf32>
    %cst_54 = arith.constant dense<0.000000e+00> : vector<128x128xf32>
    %60 = tpu.matmul %57, %59, %cst_54 {dimension_numbers = #tpu.dot_dimension_numbers<[1], [0], [0], [1], [0, 0, 1, 1], [], []>} : vector<128x128xf32>, vector<128x128xf32>, vector<128x128xf32> -> vector<128x128xf32>
    %61 = arith.addf %56, %60 : vector<128x128xf32>
    %c224 = arith.constant 224 : index
    %c0_55 = arith.constant 0 : index
    %62 = vector.load %arg7[%c224, %c0_55] : memref<384x128xf32, #tpu.memory_space<vmem>>, vector<128x128xf32>
    %c2_56 = arith.constant 2 : index
    %c0_57 = arith.constant 0 : index
    %c0_58 = arith.constant 0 : index
    %63 = vector.load %arg4[%c2_56, %c0_57, %c0_58] : memref<5x128x128xf32, #tpu.memory_space<vmem>>, vector<1x128x128xf32>
    %64 = vector.shape_cast %63 : vector<1x128x128xf32> to vector<128x128xf32>
    %cst_59 = arith.constant dense<0.000000e+00> : vector<128x128xf32>
    %65 = tpu.matmul %62, %64, %cst_59 {dimension_numbers = #tpu.dot_dimension_numbers<[1], [0], [0], [1], [0, 0, 1, 1], [], []>} : vector<128x128xf32>, vector<128x128xf32>, vector<128x128xf32> -> vector<128x128xf32>
    %66 = arith.addf %61, %65 : vector<128x128xf32>
    %c240 = arith.constant 240 : index
    %c0_60 = arith.constant 0 : index
    %67 = vector.load %arg7[%c240, %c0_60] : memref<384x128xf32, #tpu.memory_space<vmem>>, vector<128x128xf32>
    %c3_61 = arith.constant 3 : index
    %c0_62 = arith.constant 0 : index
    %c0_63 = arith.constant 0 : index
    %68 = vector.load %arg4[%c3_61, %c0_62, %c0_63] : memref<5x128x128xf32, #tpu.memory_space<vmem>>, vector<1x128x128xf32>
    %69 = vector.shape_cast %68 : vector<1x128x128xf32> to vector<128x128xf32>
    %cst_64 = arith.constant dense<0.000000e+00> : vector<128x128xf32>
    %70 = tpu.matmul %67, %69, %cst_64 {dimension_numbers = #tpu.dot_dimension_numbers<[1], [0], [0], [1], [0, 0, 1, 1], [], []>} : vector<128x128xf32>, vector<128x128xf32>, vector<128x128xf32> -> vector<128x128xf32>
    %71 = arith.addf %66, %70 : vector<128x128xf32>
    %c256_65 = arith.constant 256 : index
    %c0_66 = arith.constant 0 : index
    %72 = vector.load %arg7[%c256_65, %c0_66] : memref<384x128xf32, #tpu.memory_space<vmem>>, vector<128x128xf32>
    %c4_67 = arith.constant 4 : index
    %c0_68 = arith.constant 0 : index
    %c0_69 = arith.constant 0 : index
    %73 = vector.load %arg4[%c4_67, %c0_68, %c0_69] : memref<5x128x128xf32, #tpu.memory_space<vmem>>, vector<1x128x128xf32>
    %74 = vector.shape_cast %73 : vector<1x128x128xf32> to vector<128x128xf32>
    %cst_70 = arith.constant dense<0.000000e+00> : vector<128x128xf32>
    %75 = tpu.matmul %72, %74, %cst_70 {dimension_numbers = #tpu.dot_dimension_numbers<[1], [0], [0], [1], [0, 0, 1, 1], [], []>} : vector<128x128xf32>, vector<128x128xf32>, vector<128x128xf32> -> vector<128x128xf32>
    %76 = arith.addf %71, %75 : vector<128x128xf32>
    %77 = vector.broadcast %23 : vector<1x128xf32> to vector<128x128xf32>
    %78 = arith.addf %76, %77 : vector<128x128xf32>
    %cst_71 = arith.constant 0.000000e+00 : f32
    %79 = vector.broadcast %cst_71 : f32 to vector<128x128xf32>
    %80 = arith.maximumf %78, %79 : vector<128x128xf32>
    %c128_72 = arith.constant 128 : index
    %c0_73 = arith.constant 0 : index
    %81 = vector.load %arg6[%c128_72, %c0_73] : memref<256x128xf32, #tpu.memory_space<vmem>>, vector<128x128xf32>
    tpu.vector_store %arg6[%c128_72, %c0_73], %80 {strides = array<i32>} : memref<256x128xf32, #tpu.memory_space<vmem>>, vector<128x128xf32>,
    return
  }
  func.func @transform_0(%arg0: i32) -> (i32, i32) {
    %c0_i32 = arith.constant 0 : i32
    %c0_i32_0 = arith.constant 0 : i32
    %c0_i32_1 = arith.constant 0 : i32
    return %c0_i32, %c0_i32_0 : i32, i32
  }
  func.func @transform_1(%arg0: i32) -> (i32, i32) {
    %c0_i32 = arith.constant 0 : i32
    %c0_i32_0 = arith.constant 0 : i32
    %c0_i32_1 = arith.constant 0 : i32
    return %c0_i32, %c0_i32_0 : i32, i32
  }
  func.func @transform_2(%arg0: i32) -> (i32, i32) {
    %c0_i32 = arith.constant 0 : i32
    %c0_i32_0 = arith.constant 0 : i32
    %c0_i32_1 = arith.constant 0 : i32
    return %c0_i32, %c0_i32_0 : i32, i32
  }
  func.func @transform_3(%arg0: i32) -> (i32, i32, i32) {
    %c0_i32 = arith.constant 0 : i32
    %c0_i32_0 = arith.constant 0 : i32
    %c0_i32_1 = arith.constant 0 : i32
    %c0_i32_2 = arith.constant 0 : i32
    return %c0_i32, %c0_i32_0, %c0_i32_1 : i32, i32, i32
  }
  func.func @transform_4(%arg0: i32) -> (i32, i32) {
    %c0_i32 = arith.constant 0 : i32
    %c0_i32_0 = arith.constant 0 : i32
    %c0_i32_1 = arith.constant 0 : i32
    return %c0_i32, %c0_i32_0 : i32, i32
  }
  func.func @transform_5(%arg0: i32) -> (i32, i32) {
    %c0_i32 = arith.constant 0 : i32
    %c0_i32_0 = arith.constant 0 : i32
    %c0_i32_1 = arith.constant 0 : i32
    return %c0_i32, %c0_i32_0 : i32, i32
  }
}

</mosaic_0001>

<llo_original>
// kernel: model_forward.1
$region0: #{model_forward.1}
  #allocation0 [shape = 'u32[]', space=smem, size = 0x4, offset = 0x4, fixed_abs, tag = 'smem constant byte address 0x4 - core index']
  #allocation1 [shape = 'u32[144,128]{1,0:T(1,128)}', space=vmem, size = 0x12000, scoped, tag = 'internal scratch']
  #allocation2 [shape = 'f32[384,128]{1,0:T(8,128)}', space=vmem, size = 0x30000, scoped, tag = 'scratch operand']
  %s0 = inlined_call_operand.vmem [shape: f32[384,128], index: 0, kind: input, shape index: {}]
  %s1 = inlined_call_operand.vmem [shape: f32[128,128], index: 1, kind: input, shape index: {}]
  %s2 = inlined_call_operand.vmem [shape: f32[1,128], index: 2, kind: input, shape index: {}]
  %s3 = inlined_call_operand.vmem [shape: f32[5,128,128], index: 3, kind: input, shape index: {}]
  %s4 = inlined_call_operand.vmem [shape: f32[1,128], index: 4, kind: input, shape index: {}]
  %s5 = inlined_call_operand.vmem [shape: f32[256,128], index: 5, kind: output, shape index: {}]
  %s6 = sld [smem:[#allocation0]]
  $region30: #{model_forward.1} parent=0
    _
  %s8 = ssub.s32 1, %s6
  %s9 = scalar_select 0, %s8, %s6
  // Predicated region
  $region2: #{model_forward.1} parent=0 // pred_check
    _
  $region3: #{model_forward.1} parent=0 // pred_check_branch
    %11 = sbr.rel (0) target = $region5
  $region4: #{model_forward.1} parent=0 // pred_region
    _
  $region5: #{model_forward.1} parent=0 // pred_fallthru
    _
  // Predicated region
  $region6: #{model_forward.1} parent=0 // pred_check
    _
  $region7: #{model_forward.1} parent=0 // pred_check_branch
    %13 = sbr.rel (0) target = $region9
  $region8: #{model_forward.1} parent=0 // pred_region
    _
  $region9: #{model_forward.1} parent=0 // pred_fallthru
    _
  // Predicated region
  $region10: #{model_forward.1} parent=0 // pred_check
    _
  $region11: #{model_forward.1} parent=0 // pred_check_branch
    %15 = sbr.rel (0) target = $region13
  $region12: #{model_forward.1} parent=0 // pred_region
    _
  $region13: #{model_forward.1} parent=0 // pred_fallthru
    _
  // Predicated region
  $region14: #{model_forward.1} parent=0 // pred_check
    _
  $region15: #{model_forward.1} parent=0 // pred_check_branch
    %17 = sbr.rel (0) target = $region17
  $region16: #{model_forward.1} parent=0 // pred_region
    _
  $region17: #{model_forward.1} parent=0 // pred_fallthru
    _
  // Predicated region
  $region18: #{model_forward.1} parent=0 // pred_check
    _
  $region19: #{model_forward.1} parent=0 // pred_check_branch
    %19 = sbr.rel (0) target = $region21
  $region20: #{model_forward.1} parent=0 // pred_region
    _
  $region21: #{model_forward.1} parent=0 // pred_fallthru
    _
  %v20 = vld [vmem:[%s1] sm:$0xff]
  %v21 = vld [vmem:[%s1 + $0x8] sm:$0xff]
  %v22 = vld [vmem:[%s1 + $0x10] sm:$0xff]
  %v23 = vld [vmem:[%s1 + $0x18] sm:$0xff]
  %v24 = vld [vmem:[%s1 + $0x20] sm:$0xff]
  %v25 = vld [vmem:[%s1 + $0x28] sm:$0xff]
  %v26 = vld [vmem:[%s1 + $0x30] sm:$0xff]
  %v27 = vld [vmem:[%s1 + $0x38] sm:$0xff]
  %v28 = vld [vmem:[%s1 + $0x40] sm:$0xff]
  %v29 = vld [vmem:[%s1 + $0x48] sm:$0xff]
  %v30 = vld [vmem:[%s1 + $0x50] sm:$0xff]
  %v31 = vld [vmem:[%s1 + $0x58] sm:$0xff]
  %v32 = vld [vmem:[%s1 + $0x60] sm:$0xff]
  %v33 = vld [vmem:[%s1 + $0x68] sm:$0xff]
  %v34 = vld [vmem:[%s1 + $0x70] sm:$0xff]
  %v35 = vld [vmem:[%s1 + $0x78] sm:$0xff]
  %v36 = vld [vmem:[%s2] sm:$0x1]
  %v37 = vld [vmem:[%s0] sm:$0xff]
  %v38 = vld [vmem:[%s0 + $0x8] sm:$0xff]
  %v39 = vld [vmem:[%s0 + $0x10] sm:$0xff]
  %v40 = vld [vmem:[%s0 + $0x18] sm:$0xff]
  %v41 = vld [vmem:[%s0 + $0x20] sm:$0xff]
  %v42 = vld [vmem:[%s0 + $0x28] sm:$0xff]
  %v43 = vld [vmem:[%s0 + $0x30] sm:$0xff]
  %v44 = vld [vmem:[%s0 + $0x38] sm:$0xff]
  %v45 = vld [vmem:[%s0 + $0x40] sm:$0xff]
  %v46 = vld [vmem:[%s0 + $0x48] sm:$0xff]
  %v47 = vld [vmem:[%s0 + $0x50] sm:$0xff]
  %v48 = vld [vmem:[%s0 + $0x58] sm:$0xff]
  %v49 = vld [vmem:[%s0 + $0x60] sm:$0xff]
  %v50 = vld [vmem:[%s0 + $0x68] sm:$0xff]
  %v51 = vld [vmem:[%s0 + $0x70] sm:$0xff]
  %v52 = vld [vmem:[%s0 + $0x78] sm:$0xff]
  %v54 = vlaneseq
  %v55 = vshrl.u32 %v54, 7
  %v56 = vsub.s32 0, %v55
  %v57 = vrot.slane %v36, %v56
  %59 = vmatprep.subr.mxu0 0.0
  %60 = vmatpush1.msra.mxu0 %v20
  %61 = vmatprep.subr.mxu0 0.0
  %62 = vmatpush1.msra.mxu0 %v21
  %63 = vmatprep.subr.mxu0 0.0
  %64 = vmatpush1.msra.mxu0 %v22
  %65 = vmatprep.subr.mxu0 0.0
  %66 = vmatpush1.msra.mxu0 %v23
  %67 = vmatprep.subr.mxu0 0.0
  %68 = vmatpush1.msra.mxu0 %v24
  %69 = vmatprep.subr.mxu0 0.0
  %70 = vmatpush1.msra.mxu0 %v25
  %71 = vmatprep.subr.mxu0 0.0
  %72 = vmatpush1.msra.mxu0 %v26
  %73 = vmatprep.subr.mxu0 0.0
  %74 = vmatpush1.msra.mxu0 %v27
  %75 = vmatprep.subr.mxu0 0.0
  %76 = vmatpush1.msra.mxu0 %v28
  %77 = vmatprep.subr.mxu0 0.0
  %78 = vmatpush1.msra.mxu0 %v29
  %79 = vmatprep.subr.mxu0 0.0
  %80 = vmatpush1.msra.mxu0 %v30
  %81 = vmatprep.subr.mxu0 0.0
  %82 = vmatpush1.msra.mxu0 %v31
  %83 = vmatprep.subr.mxu0 0.0
  %84 = vmatpush1.msra.mxu0 %v32
  %85 = vmatprep.subr.mxu0 0.0
  %86 = vmatpush1.msra.mxu0 %v33
  %87 = vmatprep.subr.mxu0 0.0
  %88 = vmatpush1.msra.mxu0 %v34
  %89 = vmatprep.subr.mxu0 0.0
  %90 = vmatpush1.msra.mxu0 %v35
  %91 = vmatprep.subr.mxu0 0.0
  %92 = vmatpush1.msra.mxu0 0.0
  %93 = vmatprep.subr.mxu0 0.0
  %94 = vmatpush1.msra.mxu0 0.0
  %95 = vmatprep.subr.mxu0 0.0
  %96 = vmatpush1.msra.mxu0 0.0
  %97 = vmatprep.subr.mxu0 0.0
  %98 = vmatpush1.msra.mxu0 0.0
  %99 = vmatprep.subr.mxu0 0.0
  %100 = vmatpush1.msra.mxu0 0.0
  %101 = vmatprep.subr.mxu0 0.0
  %102 = vmatpush1.msra.mxu0 0.0
  %103 = vmatprep.subr.mxu0 0.0
  %104 = vmatpush1.msra.mxu0 0.0
  %105 = vmatprep.subr.mxu0 0.0
  %106 = vmatpush1.msra.mxu0 0.0
  %107 = vmatprep.subr.mxu0 0.0
  %108 = vmatpush1.msra.mxu0 0.0
  %109 = vmatprep.subr.mxu0 0.0
  %110 = vmatpush1.msra.mxu0 0.0
  %111 = vmatprep.subr.mxu0 0.0
  %112 = vmatpush1.msra.mxu0 0.0
  %113 = vmatprep.subr.mxu0 0.0
  %114 = vmatpush1.msra.mxu0 0.0
  %115 = vmatprep.subr.mxu0 0.0
  %116 = vmatpush1.msra.mxu0 0.0
  %117 = vmatprep.subr.mxu0 0.0
  %118 = vmatpush1.msra.mxu0 0.0
  %119 = vmatprep.subr.mxu0 0.0
  %120 = vmatpush1.msra.mxu0 0.0
  %121 = vmatprep.subr.mxu0 0.0
  %122 = vmatpush1.msra.mxu0 0.0
  %123 = vmatprep.mubr.f32.mxu0 0.0
  %124 = vmatmul.mubr.f32.gmra.mrb[0].mxu0 %v37
  %v125 = vpop.f32.mrb[0].mxu0
  %v126 = vadd.f32 %v57, %v125
  %v127 = vpop.f32.mrb[0].mxu0
  %128 = vmatprep.mubr.f32.mxu0 0.0
  %129 = vmatmul.mubr.f32.gmra.mrb[0].mxu0 %v38
  %v130 = vpop.f32.mrb[0].mxu0
  %v131 = vadd.f32 %v57, %v130
  %v132 = vpop.f32.mrb[0].mxu0
  %133 = vmatprep.mubr.f32.mxu0 0.0
  %134 = vmatmul.mubr.f32.gmra.mrb[0].mxu0 %v39
  %v135 = vpop.f32.mrb[0].mxu0
  %v136 = vadd.f32 %v57, %v135
  %v137 = vpop.f32.mrb[0].mxu0
  %138 = vmatprep.mubr.f32.mxu0 0.0
  %139 = vmatmul.mubr.f32.gmra.mrb[0].mxu0 %v40
  %v140 = vpop.f32.mrb[0].mxu0
  %v141 = vadd.f32 %v57, %v140
  %v142 = vpop.f32.mrb[0].mxu0
  %143 = vmatprep.mubr.f32.mxu0 0.0
  %144 = vmatmul.mubr.f32.gmra.mrb[0].mxu0 %v41
  %v145 = vpop.f32.mrb[0].mxu0
  %v146 = vadd.f32 %v57, %v145
  %v147 = vpop.f32.mrb[0].mxu0
  %148 = vmatprep.mubr.f32.mxu0 0.0
  %149 = vmatmul.mubr.f32.gmra.mrb[0].mxu0 %v42
  %v150 = vpop.f32.mrb[0].mxu0
  %v151 = vadd.f32 %v57, %v150
  %v152 = vpop.f32.mrb[0].mxu0
  %153 = vmatprep.mubr.f32.mxu0 0.0
  %154 = vmatmul.mubr.f32.gmra.mrb[0].mxu0 %v43
  %v155 = vpop.f32.mrb[0].mxu0
  %v156 = vadd.f32 %v57, %v155
  %v157 = vpop.f32.mrb[0].mxu0
  %158 = vmatprep.mubr.f32.mxu0 0.0
  %159 = vmatmul.mubr.f32.gmra.mrb[0].mxu0 %v44
  %v160 = vpop.f32.mrb[0].mxu0
  %v161 = vadd.f32 %v57, %v160
  %v162 = vpop.f32.mrb[0].mxu0
  %163 = vmatprep.mubr.f32.mxu0 0.0
  %164 = vmatmul.mubr.f32.gmra.mrb[0].mxu0 %v45
  %v165 = vpop.f32.mrb[0].mxu0
  %v166 = vadd.f32 %v57, %v165
  %v167 = vpop.f32.mrb[0].mxu0
  %168 = vmatprep.mubr.f32.mxu0 0.0
  %169 = vmatmul.mubr.f32.gmra.mrb[0].mxu0 %v46
  %v170 = vpop.f32.mrb[0].mxu0
  %v171 = vadd.f32 %v57, %v170
  %v172 = vpop.f32.mrb[0].mxu0
  %173 = vmatprep.mubr.f32.mxu0 0.0
  %174 = vmatmul.mubr.f32.gmra.mrb[0].mxu0 %v47
  %v175 = vpop.f32.mrb[0].mxu0
  %v176 = vadd.f32 %v57, %v175
  %v177 = vpop.f32.mrb[0].mxu0
  %178 = vmatprep.mubr.f32.mxu0 0.0
  %179 = vmatmul.mubr.f32.gmra.mrb[0].mxu0 %v48
  %v180 = vpop.f32.mrb[0].mxu0
  %v181 = vadd.f32 %v57, %v180
  %v182 = vpop.f32.mrb[0].mxu0
  %183 = vmatprep.mubr.f32.mxu0 0.0
  %184 = vmatmul.mubr.f32.gmra.mrb[0].mxu0 %v49
  %v185 = vpop.f32.mrb[0].mxu0
  %v186 = vadd.f32 %v57, %v185
  %v187 = vpop.f32.mrb[0].mxu0
  %188 = vmatprep.mubr.f32.mxu0 0.0
  %189 = vmatmul.mubr.f32.gmra.mrb[0].mxu0 %v50
  %v190 = vpop.f32.mrb[0].mxu0
  %v191 = vadd.f32 %v57, %v190
  %v192 = vpop.f32.mrb[0].mxu0
  %193 = vmatprep.mubr.f32.mxu0 0.0
  %194 = vmatmul.mubr.f32.gmra.mrb[0].mxu0 %v51
  %v195 = vpop.f32.mrb[0].mxu0
  %v196 = vadd.f32 %v57, %v195
  %v197 = vpop.f32.mrb[0].mxu0
  %198 = vmatprep.mubr.f32.mxu0 0.0
  %199 = vmatmul.mubr.f32.gmra.mrb[0].mxu0 %v52
  %v200 = vpop.f32.mrb[0].mxu0
  %v201 = vadd.f32 %v57, %v200
  %v202 = vpop.f32.mrb[0].mxu0
  %203 = vdwg.mxu0
  %v204 = vmax.f32 %v126, 0.0
  %v205 = vmax.f32 %v131, 0.0
  %v206 = vmax.f32 %v136, 0.0
  %v207 = vmax.f32 %v141, 0.0
  %v208 = vmax.f32 %v146, 0.0
  %v209 = vmax.f32 %v151, 0.0
  %v210 = vmax.f32 %v156, 0.0
  %v211 = vmax.f32 %v161, 0.0
  %v212 = vmax.f32 %v166, 0.0
  %v213 = vmax.f32 %v171, 0.0
  %v214 = vmax.f32 %v176, 0.0
  %v215 = vmax.f32 %v181, 0.0
  %v216 = vmax.f32 %v186, 0.0
  %v217 = vmax.f32 %v191, 0.0
  %v218 = vmax.f32 %v196, 0.0
  %v219 = vmax.f32 %v201, 0.0
  %220 = vst [vmem:[#allocation2] sm:$0xff] %v204
  %221 = vst [vmem:[#allocation2 + $0x8] sm:$0xff] %v205
  %222 = vst [vmem:[#allocation2 + $0x10] sm:$0xff] %v206
  %223 = vst [vmem:[#allocation2 + $0x18] sm:$0xff] %v207
  %224 = vst [vmem:[#allocation2 + $0x20] sm:$0xff] %v208
  %225 = vst [vmem:[#allocation2 + $0x28] sm:$0xff] %v209
  %226 = vst [vmem:[#allocation2 + $0x30] sm:$0xff] %v210
  %227 = vst [vmem:[#allocation2 + $0x38] sm:$0xff] %v211
  %228 = vst [vmem:[#allocation2 + $0x40] sm:$0xff] %v212
  %229 = vst [vmem:[#allocation2 + $0x48] sm:$0xff] %v213
  %230 = vst [vmem:[#allocation2 + $0x50] sm:$0xff] %v214
  %231 = vst [vmem:[#allocation2 + $0x58] sm:$0xff] %v215
  %232 = vst [vmem:[#allocation2 + $0x60] sm:$0xff] %v216
  %233 = vst [vmem:[#allocation2 + $0x68] sm:$0xff] %v217
  %234 = vst [vmem:[#allocation2 + $0x70] sm:$0xff] %v218
  %235 = vst [vmem:[#allocation2 + $0x78] sm:$0xff] %v219
  %v236 = vld [vmem:[%s0 + $0x80] sm:$0xff]
  %v237 = vld [vmem:[%s0 + $0x88] sm:$0xff]
  %v238 = vld [vmem:[%s0 + $0x90] sm:$0xff]
  %v239 = vld [vmem:[%s0 + $0x98] sm:$0xff]
  %v240 = vld [vmem:[%s0 + $0xa0] sm:$0xff]
  %v241 = vld [vmem:[%s0 + $0xa8] sm:$0xff]
  %v242 = vld [vmem:[%s0 + $0xb0] sm:$0xff]
  %v243 = vld [vmem:[%s0 + $0xb8] sm:$0xff]
  %v244 = vld [vmem:[%s0 + $0xc0] sm:$0xff]
  %v245 = vld [vmem:[%s0 + $0xc8] sm:$0xff]
  %v246 = vld [vmem:[%s0 + $0xd0] sm:$0xff]
  %v247 = vld [vmem:[%s0 + $0xd8] sm:$0xff]
  %v248 = vld [vmem:[%s0 + $0xe0] sm:$0xff]
  %v249 = vld [vmem:[%s0 + $0xe8] sm:$0xff]
  %v250 = vld [vmem:[%s0 + $0xf0] sm:$0xff]
  %v251 = vld [vmem:[%s0 + $0xf8] sm:$0xff]
  %252 = vmatprep.subr.mxu0 0.0
  %253 = vmatpush1.msra.mxu0 %v20
  %254 = vmatprep.subr.mxu0 0.0
  %255 = vmatpush1.msra.mxu0 %v21
  %256 = vmatprep.subr.mxu0 0.0
  %257 = vmatpush1.msra.mxu0 %v22
  %258 = vmatprep.subr.mxu0 0.0
  %259 = vmatpush1.msra.mxu0 %v23
  %260 = vmatprep.subr.mxu0 0.0
  %261 = vmatpush1.msra.mxu0 %v24
  %262 = vmatprep.subr.mxu0 0.0
  %263 = vmatpush1.msra.mxu0 %v25
  %264 = vmatprep.subr.mxu0 0.0
  %265 = vmatpush1.msra.mxu0 %v26
  %266 = vmatprep.subr.mxu0 0.0
  %267 = vmatpush1.msra.mxu0 %v27
  %268 = vmatprep.subr.mxu0 0.0
  %269 = vmatpush1.msra.mxu0 %v28
  %270 = vmatprep.subr.mxu0 0.0
  %271 = vmatpush1.msra.mxu0 %v29
  %272 = vmatprep.subr.mxu0 0.0
  %273 = vmatpush1.msra.mxu0 %v30
  %274 = vmatprep.subr.mxu0 0.0
  %275 = vmatpush1.msra.mxu0 %v31
  %276 = vmatprep.subr.mxu0 0.0
  %277 = vmatpush1.msra.mxu0 %v32
  %278 = vmatprep.subr.mxu0 0.0
  %279 = vmatpush1.msra.mxu0 %v33
  %280 = vmatprep.subr.mxu0 0.0
  %281 = vmatpush1.msra.mxu0 %v34
  %282 = vmatprep.subr.mxu0 0.0
  %283 = vmatpush1.msra.mxu0 %v35
  %284 = vmatprep.subr.mxu0 0.0
  %285 = vmatpush1.msra.mxu0 0.0
  %286 = vmatprep.subr.mxu0 0.0
  %287 = vmatpush1.msra.mxu0 0.0
  %288 = vmatprep.subr.mxu0 0.0
  %289 = vmatpush1.msra.mxu0 0.0
  %290 = vmatprep.subr.mxu0 0.0
  %291 = vmatpush1.msra.mxu0 0.0
  %292 = vmatprep.subr.mxu0 0.0
  %293 = vmatpush1.msra.mxu0 0.0
  %294 = vmatprep.subr.mxu0 0.0
  %295 = vmatpush1.msra.mxu0 0.0
  %296 = vmatprep.subr.mxu0 0.0
  %297 = vmatpush1.msra.mxu0 0.0
  %298 = vmatprep.subr.mxu0 0.0
  %299 = vmatpush1.msra.mxu0 0.0
  %300 = vmatprep.subr.mxu0 0.0
  %301 = vmatpush1.msra.mxu0 0.0
  %302 = vmatprep.subr.mxu0 0.0
  %303 = vmatpush1.msra.mxu0 0.0
  %304 = vmatprep.subr.mxu0 0.0
  %305 = vmatpush1.msra.mxu0 0.0
  %306 = vmatprep.subr.mxu0 0.0
  %307 = vmatpush1.msra.mxu0 0.0
  %308 = vmatprep.subr.mxu0 0.0
  %309 = vmatpush1.msra.mxu0 0.0
  %310 = vmatprep.subr.mxu0 0.0
  %311 = vmatpush1.msra.mxu0 0.0
  %312 = vmatprep.subr.mxu0 0.0
  %313 = vmatpush1.msra.mxu0 0.0
  %314 = vmatprep.subr.mxu0 0.0
  %315 = vmatpush1.msra.mxu0 0.0
  %316 = vmatprep.mubr.f32.mxu0 0.0
  %317 = vmatmul.mubr.f32.gmra.mrb[0].mxu0 %v236
  %v318 = vpop.f32.mrb[0].mxu0
  %v319 = vadd.f32 %v57, %v318
  %v320 = vpop.f32.mrb[0].mxu0
  %321 = vmatprep.mubr.f32.mxu0 0.0
  %322 = vmatmul.mubr.f32.gmra.mrb[0].mxu0 %v237
  %v323 = vpop.f32.mrb[0].mxu0
  %v324 = vadd.f32 %v57, %v323
  %v325 = vpop.f32.mrb[0].mxu0
  %326 = vmatprep.mubr.f32.mxu0 0.0
  %327 = vmatmul.mubr.f32.gmra.mrb[0].mxu0 %v238
  %v328 = vpop.f32.mrb[0].mxu0
  %v329 = vadd.f32 %v57, %v328
  %v330 = vpop.f32.mrb[0].mxu0
  %331 = vmatprep.mubr.f32.mxu0 0.0
  %332 = vmatmul.mubr.f32.gmra.mrb[0].mxu0 %v239
  %v333 = vpop.f32.mrb[0].mxu0
  %v334 = vadd.f32 %v57, %v333
  %v335 = vpop.f32.mrb[0].mxu0
  %336 = vmatprep.mubr.f32.mxu0 0.0
  %337 = vmatmul.mubr.f32.gmra.mrb[0].mxu0 %v240
  %v338 = vpop.f32.mrb[0].mxu0
  %v339 = vadd.f32 %v57, %v338
  %v340 = vpop.f32.mrb[0].mxu0
  %341 = vmatprep.mubr.f32.mxu0 0.0
  %342 = vmatmul.mubr.f32.gmra.mrb[0].mxu0 %v241
  %v343 = vpop.f32.mrb[0].mxu0
  %v344 = vadd.f32 %v57, %v343
  %v345 = vpop.f32.mrb[0].mxu0
  %346 = vmatprep.mubr.f32.mxu0 0.0
  %347 = vmatmul.mubr.f32.gmra.mrb[0].mxu0 %v242
  %v348 = vpop.f32.mrb[0].mxu0
  %v349 = vadd.f32 %v57, %v348
  %v350 = vpop.f32.mrb[0].mxu0
  %351 = vmatprep.mubr.f32.mxu0 0.0
  %352 = vmatmul.mubr.f32.gmra.mrb[0].mxu0 %v243
  %v353 = vpop.f32.mrb[0].mxu0
  %v354 = vadd.f32 %v57, %v353
  %v355 = vpop.f32.mrb[0].mxu0
  %356 = vmatprep.mubr.f32.mxu0 0.0
  %357 = vmatmul.mubr.f32.gmra.mrb[0].mxu0 %v244
  %v358 = vpop.f32.mrb[0].mxu0
  %v359 = vadd.f32 %v57, %v358
  %v360 = vpop.f32.mrb[0].mxu0
  %361 = vmatprep.mubr.f32.mxu0 0.0
  %362 = vmatmul.mubr.f32.gmra.mrb[0].mxu0 %v245
  %v363 = vpop.f32.mrb[0].mxu0
  %v364 = vadd.f32 %v57, %v363
  %v365 = vpop.f32.mrb[0].mxu0
  %366 = vmatprep.mubr.f32.mxu0 0.0
  %367 = vmatmul.mubr.f32.gmra.mrb[0].mxu0 %v246
  %v368 = vpop.f32.mrb[0].mxu0
  %v369 = vadd.f32 %v57, %v368
  %v370 = vpop.f32.mrb[0].mxu0
  %371 = vmatprep.mubr.f32.mxu0 0.0
  %372 = vmatmul.mubr.f32.gmra.mrb[0].mxu0 %v247
  %v373 = vpop.f32.mrb[0].mxu0
  %v374 = vadd.f32 %v57, %v373
  %v375 = vpop.f32.mrb[0].mxu0
  %376 = vmatprep.mubr.f32.mxu0 0.0
  %377 = vmatmul.mubr.f32.gmra.mrb[0].mxu0 %v248
  %v378 = vpop.f32.mrb[0].mxu0
  %v379 = vadd.f32 %v57, %v378
  %v380 = vpop.f32.mrb[0].mxu0
  %381 = vmatprep.mubr.f32.mxu0 0.0
  %382 = vmatmul.mubr.f32.gmra.mrb[0].mxu0 %v249
  %v383 = vpop.f32.mrb[0].mxu0
  %v384 = vadd.f32 %v57, %v383
  %v385 = vpop.f32.mrb[0].mxu0
  %386 = vmatprep.mubr.f32.mxu0 0.0
  %387 = vmatmul.mubr.f32.gmra.mrb[0].mxu0 %v250
  %v388 = vpop.f32.mrb[0].mxu0
  %v389 = vadd.f32 %v57, %v388
  %v390 = vpop.f32.mrb[0].mxu0
  %391 = vmatprep.mubr.f32.mxu0 0.0
  %392 = vmatmul.mubr.f32.gmra.mrb[0].mxu0 %v251
  %v393 = vpop.f32.mrb[0].mxu0
  %v394 = vadd.f32 %v57, %v393
  %v395 = vpop.f32.mrb[0].mxu0
  %396 = vdwg.mxu0
  %v397 = vmax.f32 %v319, 0.0
  %v398 = vmax.f32 %v324, 0.0
  %v399 = vmax.f32 %v329, 0.0
  %v400 = vmax.f32 %v334, 0.0
  %v401 = vmax.f32 %v339, 0.0
  %v402 = vmax.f32 %v344, 0.0
  %v403 = vmax.f32 %v349, 0.0
  %v404 = vmax.f32 %v354, 0.0
  %v405 = vmax.f32 %v359, 0.0
  %v406 = vmax.f32 %v364, 0.0
  %v407 = vmax.f32 %v369, 0.0
  %v408 = vmax.f32 %v374, 0.0
  %v409 = vmax.f32 %v379, 0.0
  %v410 = vmax.f32 %v384, 0.0
  %v411 = vmax.f32 %v389, 0.0
  %v412 = vmax.f32 %v394, 0.0
  %413 = vst [vmem:[#allocation2 + $0x80] sm:$0xff] %v397
  %414 = vst [vmem:[#allocation2 + $0x88] sm:$0xff] %v398
  %415 = vst [vmem:[#allocation2 + $0x90] sm:$0xff] %v399
  %416 = vst [vmem:[#allocation2 + $0x98] sm:$0xff] %v400
  %417 = vst [vmem:[#allocation2 + $0xa0] sm:$0xff] %v401
  %418 = vst [vmem:[#allocation2 + $0xa8] sm:$0xff] %v402
  %419 = vst [vmem:[#allocation2 + $0xb0] sm:$0xff] %v403
  %420 = vst [vmem:[#allocation2 + $0xb8] sm:$0xff] %v404
  %421 = vst [vmem:[#allocation2 + $0xc0] sm:$0xff] %v405
  %422 = vst [vmem:[#allocation2 + $0xc8] sm:$0xff] %v406
  %423 = vst [vmem:[#allocation2 + $0xd0] sm:$0xff] %v407
  %424 = vst [vmem:[#allocation2 + $0xd8] sm:$0xff] %v408
  %425 = vst [vmem:[#allocation2 + $0xe0] sm:$0xff] %v409
  %426 = vst [vmem:[#allocation2 + $0xe8] sm:$0xff] %v410
  %427 = vst [vmem:[#allocation2 + $0xf0] sm:$0xff] %v411
  %428 = vst [vmem:[#allocation2 + $0xf8] sm:$0xff] %v412
  %v429 = vld [vmem:[%s0 + $0x100] sm:$0xff]
  %v430 = vld [vmem:[%s0 + $0x108] sm:$0xff]
  %v431 = vld [vmem:[%s0 + $0x110] sm:$0xff]
  %v432 = vld [vmem:[%s0 + $0x118] sm:$0xff]
  %v433 = vld [vmem:[%s0 + $0x120] sm:$0xff]
  %v434 = vld [vmem:[%s0 + $0x128] sm:$0xff]
  %v435 = vld [vmem:[%s0 + $0x130] sm:$0xff]
  %v436 = vld [vmem:[%s0 + $0x138] sm:$0xff]
  %v437 = vld [vmem:[%s0 + $0x140] sm:$0xff]
  %v438 = vld [vmem:[%s0 + $0x148] sm:$0xff]
  %v439 = vld [vmem:[%s0 + $0x150] sm:$0xff]
  %v440 = vld [vmem:[%s0 + $0x158] sm:$0xff]
  %v441 = vld [vmem:[%s0 + $0x160] sm:$0xff]
  %v442 = vld [vmem:[%s0 + $0x168] sm:$0xff]
  %v443 = vld [vmem:[%s0 + $0x170] sm:$0xff]
  %v444 = vld [vmem:[%s0 + $0x178] sm:$0xff]
  %445 = vmatprep.subr.mxu0 0.0
  %446 = vmatpush1.msra.mxu0 %v20
  %447 = vmatprep.subr.mxu0 0.0
  %448 = vmatpush1.msra.mxu0 %v21
  %449 = vmatprep.subr.mxu0 0.0
  %450 = vmatpush1.msra.mxu0 %v22
  %451 = vmatprep.subr.mxu0 0.0
  %452 = vmatpush1.msra.mxu0 %v23
  %453 = vmatprep.subr.mxu0 0.0
  %454 = vmatpush1.msra.mxu0 %v24
  %455 = vmatprep.subr.mxu0 0.0
  %456 = vmatpush1.msra.mxu0 %v25
  %457 = vmatprep.subr.mxu0 0.0
  %458 = vmatpush1.msra.mxu0 %v26
  %459 = vmatprep.subr.mxu0 0.0
  %460 = vmatpush1.msra.mxu0 %v27
  %461 = vmatprep.subr.mxu0 0.0
  %462 = vmatpush1.msra.mxu0 %v28
  %463 = vmatprep.subr.mxu0 0.0
  %464 = vmatpush1.msra.mxu0 %v29
  %465 = vmatprep.subr.mxu0 0.0
  %466 = vmatpush1.msra.mxu0 %v30
  %467 = vmatprep.subr.mxu0 0.0
  %468 = vmatpush1.msra.mxu0 %v31
  %469 = vmatprep.subr.mxu0 0.0
  %470 = vmatpush1.msra.mxu0 %v32
  %471 = vmatprep.subr.mxu0 0.0
  %472 = vmatpush1.msra.mxu0 %v33
  %473 = vmatprep.subr.mxu0 0.0
  %474 = vmatpush1.msra.mxu0 %v34
  %475 = vmatprep.subr.mxu0 0.0
  %476 = vmatpush1.msra.mxu0 %v35
  %477 = vmatprep.subr.mxu0 0.0
  %478 = vmatpush1.msra.mxu0 0.0
  %479 = vmatprep.subr.mxu0 0.0
  %480 = vmatpush1.msra.mxu0 0.0
  %481 = vmatprep.subr.mxu0 0.0
  %482 = vmatpush1.msra.mxu0 0.0
  %483 = vmatprep.subr.mxu0 0.0
  %484 = vmatpush1.msra.mxu0 0.0
  %485 = vmatprep.subr.mxu0 0.0
  %486 = vmatpush1.msra.mxu0 0.0
  %487 = vmatprep.subr.mxu0 0.0
  %488 = vmatpush1.msra.mxu0 0.0
  %489 = vmatprep.subr.mxu0 0.0
  %490 = vmatpush1.msra.mxu0 0.0
  %491 = vmatprep.subr.mxu0 0.0
  %492 = vmatpush1.msra.mxu0 0.0
  %493 = vmatprep.subr.mxu0 0.0
  %494 = vmatpush1.msra.mxu0 0.0
  %495 = vmatprep.subr.mxu0 0.0
  %496 = vmatpush1.msra.mxu0 0.0
  %497 = vmatprep.subr.mxu0 0.0
  %498 = vmatpush1.msra.mxu0 0.0
  %499 = vmatprep.subr.mxu0 0.0
  %500 = vmatpush1.msra.mxu0 0.0
  %501 = vmatprep.subr.mxu0 0.0
  %502 = vmatpush1.msra.mxu0 0.0
  %503 = vmatprep.subr.mxu0 0.0
  %504 = vmatpush1.msra.mxu0 0.0
  %505 = vmatprep.subr.mxu0 0.0
  %506 = vmatpush1.msra.mxu0 0.0
  %507 = vmatprep.subr.mxu0 0.0
  %508 = vmatpush1.msra.mxu0 0.0
  %509 = vmatprep.mubr.f32.mxu0 0.0
  %510 = vmatmul.mubr.f32.gmra.mrb[0].mxu0 %v429
  %v511 = vpop.f32.mrb[0].mxu0
  %v512 = vadd.f32 %v57, %v511
  %v513 = vpop.f32.mrb[0].mxu0
  %514 = vmatprep.mubr.f32.mxu0 0.0
  %515 = vmatmul.mubr.f32.gmra.mrb[0].mxu0 %v430
  %v516 = vpop.f32.mrb[0].mxu0
  %v517 = vadd.f32 %v57, %v516
  %v518 = vpop.f32.mrb[0].mxu0
  %519 = vmatprep.mubr.f32.mxu0 0.0
  %520 = vmatmul.mubr.f32.gmra.mrb[0].mxu0 %v431
  %v521 = vpop.f32.mrb[0].mxu0
  %v522 = vadd.f32 %v57, %v521
  %v523 = vpop.f32.mrb[0].mxu0
  %524 = vmatprep.mubr.f32.mxu0 0.0
  %525 = vmatmul.mubr.f32.gmra.mrb[0].mxu0 %v432
  %v526 = vpop.f32.mrb[0].mxu0
  %v527 = vadd.f32 %v57, %v526
  %v528 = vpop.f32.mrb[0].mxu0
  %529 = vmatprep.mubr.f32.mxu0 0.0
  %530 = vmatmul.mubr.f32.gmra.mrb[0].mxu0 %v433
  %v531 = vpop.f32.mrb[0].mxu0
  %v532 = vadd.f32 %v57, %v531
  %v533 = vpop.f32.mrb[0].mxu0
  %534 = vmatprep.mubr.f32.mxu0 0.0
  %535 = vmatmul.mubr.f32.gmra.mrb[0].mxu0 %v434
  %v536 = vpop.f32.mrb[0].mxu0
  %v537 = vadd.f32 %v57, %v536
  %v538 = vpop.f32.mrb[0].mxu0
  %539 = vmatprep.mubr.f32.mxu0 0.0
  %540 = vmatmul.mubr.f32.gmra.mrb[0].mxu0 %v435
  %v541 = vpop.f32.mrb[0].mxu0
  %v542 = vadd.f32 %v57, %v541
  %v543 = vpop.f32.mrb[0].mxu0
  %544 = vmatprep.mubr.f32.mxu0 0.0
  %545 = vmatmul.mubr.f32.gmra.mrb[0].mxu0 %v436
  %v546 = vpop.f32.mrb[0].mxu0
  %v547 = vadd.f32 %v57, %v546
  %v548 = vpop.f32.mrb[0].mxu0
  %549 = vmatprep.mubr.f32.mxu0 0.0
  %550 = vmatmul.mubr.f32.gmra.mrb[0].mxu0 %v437
  %v551 = vpop.f32.mrb[0].mxu0
  %v552 = vadd.f32 %v57, %v551
  %v553 = vpop.f32.mrb[0].mxu0
  %554 = vmatprep.mubr.f32.mxu0 0.0
  %555 = vmatmul.mubr.f32.gmra.mrb[0].mxu0 %v438
  %v556 = vpop.f32.mrb[0].mxu0
  %v557 = vadd.f32 %v57, %v556
  %v558 = vpop.f32.mrb[0].mxu0
  %559 = vmatprep.mubr.f32.mxu0 0.0
  %560 = vmatmul.mubr.f32.gmra.mrb[0].mxu0 %v439
  %v561 = vpop.f32.mrb[0].mxu0
  %v562 = vadd.f32 %v57, %v561
  %v563 = vpop.f32.mrb[0].mxu0
  %564 = vmatprep.mubr.f32.mxu0 0.0
  %565 = vmatmul.mubr.f32.gmra.mrb[0].mxu0 %v440
  %v566 = vpop.f32.mrb[0].mxu0
  %v567 = vadd.f32 %v57, %v566
  %v568 = vpop.f32.mrb[0].mxu0
  %569 = vmatprep.mubr.f32.mxu0 0.0
  %570 = vmatmul.mubr.f32.gmra.mrb[0].mxu0 %v441
  %v571 = vpop.f32.mrb[0].mxu0
  %v572 = vadd.f32 %v57, %v571
  %v573 = vpop.f32.mrb[0].mxu0
  %574 = vmatprep.mubr.f32.mxu0 0.0
  %575 = vmatmul.mubr.f32.gmra.mrb[0].mxu0 %v442
  %v576 = vpop.f32.mrb[0].mxu0
  %v577 = vadd.f32 %v57, %v576
  %v578 = vpop.f32.mrb[0].mxu0
  %579 = vmatprep.mubr.f32.mxu0 0.0
  %580 = vmatmul.mubr.f32.gmra.mrb[0].mxu0 %v443
  %v581 = vpop.f32.mrb[0].mxu0
  %v582 = vadd.f32 %v57, %v581
  %v583 = vpop.f32.mrb[0].mxu0
  %584 = vmatprep.mubr.f32.mxu0 0.0
  %585 = vmatmul.mubr.f32.gmra.mrb[0].mxu0 %v444
  %v586 = vpop.f32.mrb[0].mxu0
  %v587 = vadd.f32 %v57, %v586
  %v588 = vpop.f32.mrb[0].mxu0
  %589 = vdwg.mxu0
  %v590 = vmax.f32 %v512, 0.0
  %v591 = vmax.f32 %v517, 0.0
  %v592 = vmax.f32 %v522, 0.0
  %v593 = vmax.f32 %v527, 0.0
  %v594 = vmax.f32 %v532, 0.0
  %v595 = vmax.f32 %v537, 0.0
  %v596 = vmax.f32 %v542, 0.0
  %v597 = vmax.f32 %v547, 0.0
  %v598 = vmax.f32 %v552, 0.0
  %v599 = vmax.f32 %v557, 0.0
  %v600 = vmax.f32 %v562, 0.0
  %v601 = vmax.f32 %v567, 0.0
  %v602 = vmax.f32 %v572, 0.0
  %v603 = vmax.f32 %v577, 0.0
  %v604 = vmax.f32 %v582, 0.0
  %v605 = vmax.f32 %v587, 0.0
  %606 = vst [vmem:[#allocation2 + $0x100] sm:$0xff] %v590
  %607 = vst [vmem:[#allocation2 + $0x108] sm:$0xff] %v591
  %608 = vst [vmem:[#allocation2 + $0x110] sm:$0xff] %v592
  %609 = vst [vmem:[#allocation2 + $0x118] sm:$0xff] %v593
  %610 = vst [vmem:[#allocation2 + $0x120] sm:$0xff] %v594
  %611 = vst [vmem:[#allocation2 + $0x128] sm:$0xff] %v595
  %612 = vst [vmem:[#allocation2 + $0x130] sm:$0xff] %v596
  %613 = vst [vmem:[#allocation2 + $0x138] sm:$0xff] %v597
  %614 = vst [vmem:[#allocation2 + $0x140] sm:$0xff] %v598
  %615 = vst [vmem:[#allocation2 + $0x148] sm:$0xff] %v599
  %616 = vst [vmem:[#allocation2 + $0x150] sm:$0xff] %v600
  %617 = vst [vmem:[#allocation2 + $0x158] sm:$0xff] %v601
  %618 = vst [vmem:[#allocation2 + $0x160] sm:$0xff] %v602
  %619 = vst [vmem:[#allocation2 + $0x168] sm:$0xff] %v603
  %620 = vst [vmem:[#allocation2 + $0x170] sm:$0xff] %v604
  %621 = vst [vmem:[#allocation2 + $0x178] sm:$0xff] %v605
  %v622 = vld [vmem:[%s4] sm:$0x1]
  %v623 = vld [vmem:[#allocation2] sm:$0xff]
  %v624 = vld [vmem:[#allocation2 + $0x8] sm:$0xff]
  %v625 = vld [vmem:[#allocation2 + $0x10] sm:$0xff]
  %v626 = vld [vmem:[#allocation2 + $0x18] sm:$0xff]
  %v627 = vld [vmem:[#allocation2 + $0x20] sm:$0xff]
  %v628 = vld [vmem:[#allocation2 + $0x28] sm:$0xff]
  %v629 = vld [vmem:[#allocation2 + $0x30] sm:$0xff]
  %v630 = vld [vmem:[#allocation2 + $0x38] sm:$0xff]
  %v631 = vld [vmem:[#allocation2 + $0x40] sm:$0xff]
  %v632 = vld [vmem:[#allocation2 + $0x48] sm:$0xff]
  %v633 = vld [vmem:[#allocation2 + $0x50] sm:$0xff]
  %v634 = vld [vmem:[#allocation2 + $0x58] sm:$0xff]
  %v635 = vld [vmem:[#allocation2 + $0x60] sm:$0xff]
  %v636 = vld [vmem:[#allocation2 + $0x68] sm:$0xff]
  %v637 = vld [vmem:[#allocation2 + $0x70] sm:$0xff]
  %v638 = vld [vmem:[#allocation2 + $0x78] sm:$0xff]
  %v639 = vld [vmem:[%s3] sm:$0xff]
  %v640 = vld [vmem:[%s3 + $0x8] sm:$0xff]
  %v641 = vld [vmem:[%s3 + $0x10] sm:$0xff]
  %v642 = vld [vmem:[%s3 + $0x18] sm:$0xff]
  %v643 = vld [vmem:[%s3 + $0x20] sm:$0xff]
  %v644 = vld [vmem:[%s3 + $0x28] sm:$0xff]
  %v645 = vld [vmem:[%s3 + $0x30] sm:$0xff]
  %v646 = vld [vmem:[%s3 + $0x38] sm:$0xff]
  %v647 = vld [vmem:[%s3 + $0x40] sm:$0xff]
  %v648 = vld [vmem:[%s3 + $0x48] sm:$0xff]
  %v649 = vld [vmem:[%s3 + $0x50] sm:$0xff]
  %v650 = vld [vmem:[%s3 + $0x58] sm:$0xff]
  %v651 = vld [vmem:[%s3 + $0x60] sm:$0xff]
  %v652 = vld [vmem:[%s3 + $0x68] sm:$0xff]
  %v653 = vld [vmem:[%s3 + $0x70] sm:$0xff]
  %v654 = vld [vmem:[%s3 + $0x78] sm:$0xff]
  %v655 = vld [vmem:[#allocation2 + $0x80] sm:$0xff]
  %v656 = vld [vmem:[#allocation2 + $0x88] sm:$0xff]
  %s657 = scalar_lea.vmem %s3, 128
  %v658 = vld [vmem:[%s657] sm:$0xff]
  %v659 = vld [vmem:[%s657 + $0x8] sm:$0xff]
  %v660 = vld [vmem:[%s657 + $0x10] sm:$0xff]
  %v661 = vld [vmem:[%s657 + $0x18] sm:$0xff]
  %v662 = vld [vmem:[%s657 + $0x20] sm:$0xff]
  %v663 = vld [vmem:[%s657 + $0x28] sm:$0xff]
  %v664 = vld [vmem:[%s657 + $0x30] sm:$0xff]
  %v665 = vld [vmem:[%s657 + $0x38] sm:$0xff]
  %v666 = vld [vmem:[%s657 + $0x40] sm:$0xff]
  %v667 = vld [vmem:[%s657 + $0x48] sm:$0xff]
  %v668 = vld [vmem:[%s657 + $0x50] sm:$0xff]
  %v669 = vld [vmem:[%s657 + $0x58] sm:$0xff]
  %v670 = vld [vmem:[%s657 + $0x60] sm:$0xff]
  %v671 = vld [vmem:[%s657 + $0x68] sm:$0xff]
  %v672 = vld [vmem:[%s657 + $0x70] sm:$0xff]
  %v673 = vld [vmem:[%s657 + $0x78] sm:$0xff]
  %674 = vmatprep.subr.mxu0 0.0
  %675 = vmatpush1.msra.mxu0 %v658
  %676 = vmatprep.subr.mxu0 0.0
  %677 = vmatpush1.msra.mxu0 %v659
  %678 = vmatprep.subr.mxu0 0.0
  %679 = vmatpush1.msra.mxu0 %v660
  %680 = vmatprep.subr.mxu0 0.0
  %681 = vmatpush1.msra.mxu0 %v661
  %682 = vmatprep.subr.mxu0 0.0
  %683 = vmatpush1.msra.mxu0 %v662
  %684 = vmatprep.subr.mxu0 0.0
  %685 = vmatpush1.msra.mxu0 %v663
  %686 = vmatprep.subr.mxu0 0.0
  %687 = vmatpush1.msra.mxu0 %v664
  %688 = vmatprep.subr.mxu0 0.0
  %689 = vmatpush1.msra.mxu0 %v665
  %690 = vmatprep.subr.mxu0 0.0
  %691 = vmatpush1.msra.mxu0 %v666
  %692 = vmatprep.subr.mxu0 0.0
  %693 = vmatpush1.msra.mxu0 %v667
  %694 = vmatprep.subr.mxu0 0.0
  %695 = vmatpush1.msra.mxu0 %v668
  %696 = vmatprep.subr.mxu0 0.0
  %697 = vmatpush1.msra.mxu0 %v669
  %698 = vmatprep.subr.mxu0 0.0
  %699 = vmatpush1.msra.mxu0 %v670
  %700 = vmatprep.subr.mxu0 0.0
  %701 = vmatpush1.msra.mxu0 %v671
  %702 = vmatprep.subr.mxu0 0.0
  %703 = vmatpush1.msra.mxu0 %v672
  %704 = vmatprep.subr.mxu0 0.0
  %705 = vmatpush1.msra.mxu0 %v673
  %706 = vmatprep.subr.mxu0 0.0
  %707 = vmatpush1.msra.mxu0 0.0
  %708 = vmatprep.subr.mxu0 0.0
  %709 = vmatpush1.msra.mxu0 0.0
  %710 = vmatprep.subr.mxu0 0.0
  %711 = vmatpush1.msra.mxu0 0.0
  %712 = vmatprep.subr.mxu0 0.0
  %713 = vmatpush1.msra.mxu0 0.0
  %714 = vmatprep.subr.mxu0 0.0
  %715 = vmatpush1.msra.mxu0 0.0
  %716 = vmatprep.subr.mxu0 0.0
  %717 = vmatpush1.msra.mxu0 0.0
  %718 = vmatprep.subr.mxu0 0.0
  %719 = vmatpush1.msra.mxu0 0.0
  %720 = vmatprep.subr.mxu0 0.0
  %721 = vmatpush1.msra.mxu0 0.0
  %722 = vmatprep.subr.mxu0 0.0
  %723 = vmatpush1.msra.mxu0 0.0
  %724 = vmatprep.subr.mxu0 0.0
  %725 = vmatpush1.msra.mxu0 0.0
  %726 = vmatprep.subr.mxu0 0.0
  %727 = vmatpush1.msra.mxu0 0.0
  %728 = vmatprep.subr.mxu0 0.0
  %729 = vmatpush1.msra.mxu0 0.0
  %730 = vmatprep.subr.mxu0 0.0
  %731 = vmatpush1.msra.mxu0 0.0
  %732 = vmatprep.subr.mxu0 0.0
  %733 = vmatpush1.msra.mxu0 0.0
  %734 = vmatprep.subr.mxu0 0.0
  %735 = vmatpush1.msra.mxu0 0.0
  %736 = vmatprep.subr.mxu0 0.0
  %737 = vmatpush1.msra.mxu0 0.0
  %738 = vmatprep.mubr.f32.mxu0 0.0
  %739 = vmatmul.mubr.f32.gmra.mrb[0].mxu0 %v625
  %v740 = vpop.f32.mrb[0].mxu0
  %v741 = vadd.f32 0.0, %v740
  %v742 = vpop.f32.mrb[0].mxu0
  %743 = vmatprep.mubr.f32.mxu0 0.0
  %744 = vmatmul.mubr.f32.gmra.mrb[0].mxu0 %v626
  %v745 = vpop.f32.mrb[0].mxu0
  %v746 = vadd.f32 0.0, %v745
  %v747 = vpop.f32.mrb[0].mxu0
  %748 = vmatprep.mubr.f32.mxu0 0.0
  %749 = vmatmul.mubr.f32.gmra.mrb[0].mxu0 %v627
  %v750 = vpop.f32.mrb[0].mxu0
  %v751 = vadd.f32 0.0, %v750
  %v752 = vpop.f32.mrb[0].mxu0
  %753 = vmatprep.mubr.f32.mxu0 0.0
  %754 = vmatmul.mubr.f32.gmra.mrb[0].mxu0 %v628
  %v755 = vpop.f32.mrb[0].mxu0
  %v756 = vadd.f32 0.0, %v755
  %v757 = vpop.f32.mrb[0].mxu0
  %758 = vmatprep.mubr.f32.mxu0 0.0
  %759 = vmatmul.mubr.f32.gmra.mrb[0].mxu0 %v629
  %v760 = vpop.f32.mrb[0].mxu0
  %v761 = vadd.f32 0.0, %v760
  %v762 = vpop.f32.mrb[0].mxu0
  %763 = vmatprep.mubr.f32.mxu0 0.0
  %764 = vmatmul.mubr.f32.gmra.mrb[0].mxu0 %v630
  %v765 = vpop.f32.mrb[0].mxu0
  %v766 = vadd.f32 0.0, %v765
  %v767 = vpop.f32.mrb[0].mxu0
  %768 = vmatprep.mubr.f32.mxu0 0.0
  %769 = vmatmul.mubr.f32.gmra.mrb[0].mxu0 %v631
  %v770 = vpop.f32.mrb[0].mxu0
  %v771 = vadd.f32 0.0, %v770
  %v772 = vpop.f32.mrb[0].mxu0
  %773 = vmatprep.mubr.f32.mxu0 0.0
  %774 = vmatmul.mubr.f32.gmra.mrb[0].mxu0 %v632
  %v775 = vpop.f32.mrb[0].mxu0
  %v776 = vadd.f32 0.0, %v775
  %v777 = vpop.f32.mrb[0].mxu0
  %778 = vmatprep.mubr.f32.mxu0 0.0
  %779 = vmatmul.mubr.f32.gmra.mrb[0].mxu0 %v633
  %v780 = vpop.f32.mrb[0].mxu0
  %v781 = vadd.f32 0.0, %v780
  %v782 = vpop.f32.mrb[0].mxu0
  %783 = vmatprep.mubr.f32.mxu0 0.0
  %784 = vmatmul.mubr.f32.gmra.mrb[0].mxu0 %v634
  %v785 = vpop.f32.mrb[0].mxu0
  %v786 = vadd.f32 0.0, %v785
  %v787 = vpop.f32.mrb[0].mxu0
  %788 = vmatprep.mubr.f32.mxu0 0.0
  %789 = vmatmul.mubr.f32.gmra.mrb[0].mxu0 %v635
  %v790 = vpop.f32.mrb[0].mxu0
  %v791 = vadd.f32 0.0, %v790
  %v792 = vpop.f32.mrb[0].mxu0
  %793 = vmatprep.mubr.f32.mxu0 0.0
  %794 = vmatmul.mubr.f32.gmra.mrb[0].mxu0 %v636
  %v795 = vpop.f32.mrb[0].mxu0
  %v796 = vadd.f32 0.0, %v795
  %v797 = vpop.f32.mrb[0].mxu0
  %798 = vmatprep.mubr.f32.mxu0 0.0
  %799 = vmatmul.mubr.f32.gmra.mrb[0].mxu0 %v637
  %v800 = vpop.f32.mrb[0].mxu0
  %v801 = vadd.f32 0.0, %v800
  %v802 = vpop.f32.mrb[0].mxu0
  %803 = vmatprep.mubr.f32.mxu0 0.0
  %804 = vmatmul.mubr.f32.gmra.mrb[0].mxu0 %v638
  %v805 = vpop.f32.mrb[0].mxu0
  %v806 = vadd.f32 0.0, %v805
  %v807 = vpop.f32.mrb[0].mxu0
  %808 = vmatprep.mubr.f32.mxu0 0.0
  %809 = vmatmul.mubr.f32.gmra.mrb[0].mxu0 %v655
  %v810 = vpop.f32.mrb[0].mxu0
  %v811 = vadd.f32 0.0, %v810
  %v812 = vpop.f32.mrb[0].mxu0
  %813 = vmatprep.mubr.f32.mxu0 0.0
  %814 = vmatmul.mubr.f32.gmra.mrb[0].mxu0 %v656
  %v815 = vpop.f32.mrb[0].mxu0
  %v816 = vadd.f32 0.0, %v815
  %v817 = vpop.f32.mrb[0].mxu0
  %818 = vdwg.mxu0
  %819 = vmatprep.subr.mxu0 0.0
  %820 = vmatpush1.msra.mxu0 %v639
  %821 = vmatprep.subr.mxu0 0.0
  %822 = vmatpush1.msra.mxu0 %v640
  %823 = vmatprep.subr.mxu0 0.0
  %824 = vmatpush1.msra.mxu0 %v641
  %825 = vmatprep.subr.mxu0 0.0
  %826 = vmatpush1.msra.mxu0 %v642
  %827 = vmatprep.subr.mxu0 0.0
  %828 = vmatpush1.msra.mxu0 %v643
  %829 = vmatprep.subr.mxu0 0.0
  %830 = vmatpush1.msra.mxu0 %v644
  %831 = vmatprep.subr.mxu0 0.0
  %832 = vmatpush1.msra.mxu0 %v645
  %833 = vmatprep.subr.mxu0 0.0
  %834 = vmatpush1.msra.mxu0 %v646
  %835 = vmatprep.subr.mxu0 0.0
  %836 = vmatpush1.msra.mxu0 %v647
  %837 = vmatprep.subr.mxu0 0.0
  %838 = vmatpush1.msra.mxu0 %v648
  %839 = vmatprep.subr.mxu0 0.0
  %840 = vmatpush1.msra.mxu0 %v649
  %841 = vmatprep.subr.mxu0 0.0
  %842 = vmatpush1.msra.mxu0 %v650
  %843 = vmatprep.subr.mxu0 0.0
  %844 = vmatpush1.msra.mxu0 %v651
  %845 = vmatprep.subr.mxu0 0.0
  %846 = vmatpush1.msra.mxu0 %v652
  %847 = vmatprep.subr.mxu0 0.0
  %848 = vmatpush1.msra.mxu0 %v653
  %849 = vmatprep.subr.mxu0 0.0
  %850 = vmatpush1.msra.mxu0 %v654
  %851 = vmatprep.subr.mxu0 0.0
  %852 = vmatpush1.msra.mxu0 0.0
  %853 = vmatprep.subr.mxu0 0.0
  %854 = vmatpush1.msra.mxu0 0.0
  %855 = vmatprep.subr.mxu0 0.0
  %856 = vmatpush1.msra.mxu0 0.0
  %857 = vmatprep.subr.mxu0 0.0
  %858 = vmatpush1.msra.mxu0 0.0
  %859 = vmatprep.subr.mxu0 0.0
  %860 = vmatpush1.msra.mxu0 0.0
  %861 = vmatprep.subr.mxu0 0.0
  %862 = vmatpush1.msra.mxu0 0.0
  %863 = vmatprep.subr.mxu0 0.0
  %864 = vmatpush1.msra.mxu0 0.0
  %865 = vmatprep.subr.mxu0 0.0
  %866 = vmatpush1.msra.mxu0 0.0
  %867 = vmatprep.subr.mxu0 0.0
  %868 = vmatpush1.msra.mxu0 0.0
  %869 = vmatprep.subr.mxu0 0.0
  %870 = vmatpush1.msra.mxu0 0.0
  %871 = vmatprep.subr.mxu0 0.0
  %872 = vmatpush1.msra.mxu0 0.0
  %873 = vmatprep.subr.mxu0 0.0
  %874 = vmatpush1.msra.mxu0 0.0
  %875 = vmatprep.subr.mxu0 0.0
  %876 = vmatpush1.msra.mxu0 0.0
  %877 = vmatprep.subr.mxu0 0.0
  %878 = vmatpush1.msra.mxu0 0.0
  %879 = vmatprep.subr.mxu0 0.0
  %880 = vmatpush1.msra.mxu0 0.0
  %881 = vmatprep.subr.mxu0 0.0
  %882 = vmatpush1.msra.mxu0 0.0
  %883 = vmatprep.mubr.f32.mxu0 0.0
  %884 = vmatmul.mubr.f32.gmra.mrb[0].mxu0 %v623
  %v885 = vpop.f32.mrb[0].mxu0
  %v886 = vadd.f32 %v741, %v885
  %v887 = vpop.f32.mrb[0].mxu0
  %888 = vmatprep.mubr.f32.mxu0 0.0
  %889 = vmatmul.mubr.f32.gmra.mrb[0].mxu0 %v624
  %v890 = vpop.f32.mrb[0].mxu0
  %v891 = vadd.f32 %v746, %v890
  %v892 = vpop.f32.mrb[0].mxu0
  %893 = vmatprep.mubr.f32.mxu0 0.0
  %894 = vmatmul.mubr.f32.gmra.mrb[0].mxu0 %v625
  %v895 = vpop.f32.mrb[0].mxu0
  %v896 = vadd.f32 %v751, %v895
  %v897 = vpop.f32.mrb[0].mxu0
  %898 = vmatprep.mubr.f32.mxu0 0.0
  %899 = vmatmul.mubr.f32.gmra.mrb[0].mxu0 %v626
  %v900 = vpop.f32.mrb[0].mxu0
  %v901 = vadd.f32 %v756, %v900
  %v902 = vpop.f32.mrb[0].mxu0
  %903 = vmatprep.mubr.f32.mxu0 0.0
  %904 = vmatmul.mubr.f32.gmra.mrb[0].mxu0 %v627
  %v905 = vpop.f32.mrb[0].mxu0
  %v906 = vadd.f32 %v761, %v905
  %v907 = vpop.f32.mrb[0].mxu0
  %908 = vmatprep.mubr.f32.mxu0 0.0
  %909 = vmatmul.mubr.f32.gmra.mrb[0].mxu0 %v628
  %v910 = vpop.f32.mrb[0].mxu0
  %v911 = vadd.f32 %v766, %v910
  %v912 = vpop.f32.mrb[0].mxu0
  %913 = vmatprep.mubr.f32.mxu0 0.0
  %914 = vmatmul.mubr.f32.gmra.mrb[0].mxu0 %v629
  %v915 = vpop.f32.mrb[0].mxu0
  %v916 = vadd.f32 %v771, %v915
  %v917 = vpop.f32.mrb[0].mxu0
  %918 = vmatprep.mubr.f32.mxu0 0.0
  %919 = vmatmul.mubr.f32.gmra.mrb[0].mxu0 %v630
  %v920 = vpop.f32.mrb[0].mxu0
  %v921 = vadd.f32 %v776, %v920
  %v922 = vpop.f32.mrb[0].mxu0
  %923 = vmatprep.mubr.f32.mxu0 0.0
  %924 = vmatmul.mubr.f32.gmra.mrb[0].mxu0 %v631
  %v925 = vpop.f32.mrb[0].mxu0
  %v926 = vadd.f32 %v781, %v925
  %v927 = vpop.f32.mrb[0].mxu0
  %928 = vmatprep.mubr.f32.mxu0 0.0
  %929 = vmatmul.mubr.f32.gmra.mrb[0].mxu0 %v632
  %v930 = vpop.f32.mrb[0].mxu0
  %v931 = vadd.f32 %v786, %v930
  %v932 = vpop.f32.mrb[0].mxu0
  %933 = vmatprep.mubr.f32.mxu0 0.0
  %934 = vmatmul.mubr.f32.gmra.mrb[0].mxu0 %v633
  %v935 = vpop.f32.mrb[0].mxu0
  %v936 = vadd.f32 %v791, %v935
  %v937 = vpop.f32.mrb[0].mxu0
  %938 = vmatprep.mubr.f32.mxu0 0.0
  %939 = vmatmul.mubr.f32.gmra.mrb[0].mxu0 %v634
  %v940 = vpop.f32.mrb[0].mxu0
  %v941 = vadd.f32 %v796, %v940
  %v942 = vpop.f32.mrb[0].mxu0
  %943 = vmatprep.mubr.f32.mxu0 0.0
  %944 = vmatmul.mubr.f32.gmra.mrb[0].mxu0 %v635
  %v945 = vpop.f32.mrb[0].mxu0
  %v946 = vadd.f32 %v801, %v945
  %v947 = vpop.f32.mrb[0].mxu0
  %948 = vmatprep.mubr.f32.mxu0 0.0
  %949 = vmatmul.mubr.f32.gmra.mrb[0].mxu0 %v636
  %v950 = vpop.f32.mrb[0].mxu0
  %v951 = vadd.f32 %v806, %v950
  %v952 = vpop.f32.mrb[0].mxu0
  %953 = vmatprep.mubr.f32.mxu0 0.0
  %954 = vmatmul.mubr.f32.gmra.mrb[0].mxu0 %v637
  %v955 = vpop.f32.mrb[0].mxu0
  %v956 = vadd.f32 %v811, %v955
  %v957 = vpop.f32.mrb[0].mxu0
  %958 = vmatprep.mubr.f32.mxu0 0.0
  %959 = vmatmul.mubr.f32.gmra.mrb[0].mxu0 %v638
  %v960 = vpop.f32.mrb[0].mxu0
  %v961 = vadd.f32 %v816, %v960
  %v962 = vpop.f32.mrb[0].mxu0
  %963 = vdwg.mxu0
  %v964 = vld [vmem:[#allocation2 + $0x20] sm:$0xff]
  %v965 = vld [vmem:[#allocation2 + $0x28] sm:$0xff]
  %v966 = vld [vmem:[#allocation2 + $0x30] sm:$0xff]
  %v967 = vld [vmem:[#allocation2 + $0x38] sm:$0xff]
  %v968 = vld [vmem:[#allocation2 + $0x40] sm:$0xff]
  %v969 = vld [vmem:[#allocation2 + $0x48] sm:$0xff]
  %v970 = vld [vmem:[#allocation2 + $0x50] sm:$0xff]
  %v971 = vld [vmem:[#allocation2 + $0x58] sm:$0xff]
  %v972 = vld [vmem:[#allocation2 + $0x60] sm:$0xff]
  %v973 = vld [vmem:[#allocation2 + $0x68] sm:$0xff]
  %v974 = vld [vmem:[#allocation2 + $0x70] sm:$0xff]
  %v975 = vld [vmem:[#allocation2 + $0x78] sm:$0xff]
  %v976 = vld [vmem:[#allocation2 + $0x80] sm:$0xff]
  %v977 = vld [vmem:[#allocation2 + $0x88] sm:$0xff]
  %v978 = vld [vmem:[#allocation2 + $0x90] sm:$0xff]
  %v979 = vld [vmem:[#allocation2 + $0x98] sm:$0xff]
  %s980 = scalar_lea.vmem %s3, 256
  %v981 = vld [vmem:[%s980] sm:$0xff]
  %v982 = vld [vmem:[%s980 + $0x8] sm:$0xff]
  %v983 = vld [vmem:[%s980 + $0x10] sm:$0xff]
  %v984 = vld [vmem:[%s980 + $0x18] sm:$0xff]
  %v985 = vld [vmem:[%s980 + $0x20] sm:$0xff]
  %v986 = vld [vmem:[%s980 + $0x28] sm:$0xff]
  %v987 = vld [vmem:[%s980 + $0x30] sm:$0xff]
  %v988 = vld [vmem:[%s980 + $0x38] sm:$0xff]
  %v989 = vld [vmem:[%s980 + $0x40] sm:$0xff]
  %v990 = vld [vmem:[%s980 + $0x48] sm:$0xff]
  %v991 = vld [vmem:[%s980 + $0x50] sm:$0xff]
  %v992 = vld [vmem:[%s980 + $0x58] sm:$0xff]
  %v993 = vld [vmem:[%s980 + $0x60] sm:$0xff]
  %v994 = vld [vmem:[%s980 + $0x68] sm:$0xff]
  %v995 = vld [vmem:[%s980 + $0x70] sm:$0xff]
  %v996 = vld [vmem:[%s980 + $0x78] sm:$0xff]
  %997 = vmatprep.subr.mxu0 0.0
  %998 = vmatpush1.msra.mxu0 %v981
  %999 = vmatprep.subr.mxu0 0.0
  %1000 = vmatpush1.msra.mxu0 %v982
  %1001 = vmatprep.subr.mxu0 0.0
  %1002 = vmatpush1.msra.mxu0 %v983
  %1003 = vmatprep.subr.mxu0 0.0
  %1004 = vmatpush1.msra.mxu0 %v984
  %1005 = vmatprep.subr.mxu0 0.0
  %1006 = vmatpush1.msra.mxu0 %v985
  %1007 = vmatprep.subr.mxu0 0.0
  %1008 = vmatpush1.msra.mxu0 %v986
  %1009 = vmatprep.subr.mxu0 0.0
  %1010 = vmatpush1.msra.mxu0 %v987
  %1011 = vmatprep.subr.mxu0 0.0
  %1012 = vmatpush1.msra.mxu0 %v988
  %1013 = vmatprep.subr.mxu0 0.0
  %1014 = vmatpush1.msra.mxu0 %v989
  %1015 = vmatprep.subr.mxu0 0.0
  %1016 = vmatpush1.msra.mxu0 %v990
  %1017 = vmatprep.subr.mxu0 0.0
  %1018 = vmatpush1.msra.mxu0 %v991
  %1019 = vmatprep.subr.mxu0 0.0
  %1020 = vmatpush1.msra.mxu0 %v992
  %1021 = vmatprep.subr.mxu0 0.0
  %1022 = vmatpush1.msra.mxu0 %v993
  %1023 = vmatprep.subr.mxu0 0.0
  %1024 = vmatpush1.msra.mxu0 %v994
  %1025 = vmatprep.subr.mxu0 0.0
  %1026 = vmatpush1.msra.mxu0 %v995
  %1027 = vmatprep.subr.mxu0 0.0
  %1028 = vmatpush1.msra.mxu0 %v996
  %1029 = vmatprep.subr.mxu0 0.0
  %1030 = vmatpush1.msra.mxu0 0.0
  %1031 = vmatprep.subr.mxu0 0.0
  %1032 = vmatpush1.msra.mxu0 0.0
  %1033 = vmatprep.subr.mxu0 0.0
  %1034 = vmatpush1.msra.mxu0 0.0
  %1035 = vmatprep.subr.mxu0 0.0
  %1036 = vmatpush1.msra.mxu0 0.0
  %1037 = vmatprep.subr.mxu0 0.0
  %1038 = vmatpush1.msra.mxu0 0.0
  %1039 = vmatprep.subr.mxu0 0.0
  %1040 = vmatpush1.msra.mxu0 0.0
  %1041 = vmatprep.subr.mxu0 0.0
  %1042 = vmatpush1.msra.mxu0 0.0
  %1043 = vmatprep.subr.mxu0 0.0
  %1044 = vmatpush1.msra.mxu0 0.0
  %1045 = vmatprep.subr.mxu0 0.0
  %1046 = vmatpush1.msra.mxu0 0.0
  %1047 = vmatprep.subr.mxu0 0.0
  %1048 = vmatpush1.msra.mxu0 0.0
  %1049 = vmatprep.subr.mxu0 0.0
  %1050 = vmatpush1.msra.mxu0 0.0
  %1051 = vmatprep.subr.mxu0 0.0
  %1052 = vmatpush1.msra.mxu0 0.0
  %1053 = vmatprep.subr.mxu0 0.0
  %1054 = vmatpush1.msra.mxu0 0.0
  %1055 = vmatprep.subr.mxu0 0.0
  %1056 = vmatpush1.msra.mxu0 0.0
  %1057 = vmatprep.subr.mxu0 0.0
  %1058 = vmatpush1.msra.mxu0 0.0
  %1059 = vmatprep.subr.mxu0 0.0
  %1060 = vmatpush1.msra.mxu0 0.0
  %1061 = vmatprep.mubr.f32.mxu0 0.0
  %1062 = vmatmul.mubr.f32.gmra.mrb[0].mxu0 %v964
  %v1063 = vpop.f32.mrb[0].mxu0
  %v1064 = vadd.f32 0.0, %v1063
  %v1065 = vpop.f32.mrb[0].mxu0
  %1066 = vmatprep.mubr.f32.mxu0 0.0
  %1067 = vmatmul.mubr.f32.gmra.mrb[0].mxu0 %v965
  %v1068 = vpop.f32.mrb[0].mxu0
  %v1069 = vadd.f32 0.0, %v1068
  %v1070 = vpop.f32.mrb[0].mxu0
  %1071 = vmatprep.mubr.f32.mxu0 0.0
  %1072 = vmatmul.mubr.f32.gmra.mrb[0].mxu0 %v966
  %v1073 = vpop.f32.mrb[0].mxu0
  %v1074 = vadd.f32 0.0, %v1073
  %v1075 = vpop.f32.mrb[0].mxu0
  %1076 = vmatprep.mubr.f32.mxu0 0.0
  %1077 = vmatmul.mubr.f32.gmra.mrb[0].mxu0 %v967
  %v1078 = vpop.f32.mrb[0].mxu0
  %v1079 = vadd.f32 0.0, %v1078
  %v1080 = vpop.f32.mrb[0].mxu0
  %1081 = vmatprep.mubr.f32.mxu0 0.0
  %1082 = vmatmul.mubr.f32.gmra.mrb[0].mxu0 %v968
  %v1083 = vpop.f32.mrb[0].mxu0
  %v1084 = vadd.f32 0.0, %v1083
  %v1085 = vpop.f32.mrb[0].mxu0
  %1086 = vmatprep.mubr.f32.mxu0 0.0
  %1087 = vmatmul.mubr.f32.gmra.mrb[0].mxu0 %v969
  %v1088 = vpop.f32.mrb[0].mxu0
  %v1089 = vadd.f32 0.0, %v1088
  %v1090 = vpop.f32.mrb[0].mxu0
  %1091 = vmatprep.mubr.f32.mxu0 0.0
  %1092 = vmatmul.mubr.f32.gmra.mrb[0].mxu0 %v970
  %v1093 = vpop.f32.mrb[0].mxu0
  %v1094 = vadd.f32 0.0, %v1093
  %v1095 = vpop.f32.mrb[0].mxu0
  %1096 = vmatprep.mubr.f32.mxu0 0.0
  %1097 = vmatmul.mubr.f32.gmra.mrb[0].mxu0 %v971
  %v1098 = vpop.f32.mrb[0].mxu0
  %v1099 = vadd.f32 0.0, %v1098
  %v1100 = vpop.f32.mrb[0].mxu0
  %1101 = vmatprep.mubr.f32.mxu0 0.0
  %1102 = vmatmul.mubr.f32.gmra.mrb[0].mxu0 %v972
  %v1103 = vpop.f32.mrb[0].mxu0
  %v1104 = vadd.f32 0.0, %v1103
  %v1105 = vpop.f32.mrb[0].mxu0
  %1106 = vmatprep.mubr.f32.mxu0 0.0
  %1107 = vmatmul.mubr.f32.gmra.mrb[0].mxu0 %v973
  %v1108 = vpop.f32.mrb[0].mxu0
  %v1109 = vadd.f32 0.0, %v1108
  %v1110 = vpop.f32.mrb[0].mxu0
  %1111 = vmatprep.mubr.f32.mxu0 0.0
  %1112 = vmatmul.mubr.f32.gmra.mrb[0].mxu0 %v974
  %v1113 = vpop.f32.mrb[0].mxu0
  %v1114 = vadd.f32 0.0, %v1113
  %v1115 = vpop.f32.mrb[0].mxu0
  %1116 = vmatprep.mubr.f32.mxu0 0.0
  %1117 = vmatmul.mubr.f32.gmra.mrb[0].mxu0 %v975
  %v1118 = vpop.f32.mrb[0].mxu0
  %v1119 = vadd.f32 0.0, %v1118
  %v1120 = vpop.f32.mrb[0].mxu0
  %1121 = vmatprep.mubr.f32.mxu0 0.0
  %1122 = vmatmul.mubr.f32.gmra.mrb[0].mxu0 %v976
  %v1123 = vpop.f32.mrb[0].mxu0
  %v1124 = vadd.f32 0.0, %v1123
  %v1125 = vpop.f32.mrb[0].mxu0
  %1126 = vmatprep.mubr.f32.mxu0 0.0
  %1127 = vmatmul.mubr.f32.gmra.mrb[0].mxu0 %v977
  %v1128 = vpop.f32.mrb[0].mxu0
  %v1129 = vadd.f32 0.0, %v1128
  %v1130 = vpop.f32.mrb[0].mxu0
  %1131 = vmatprep.mubr.f32.mxu0 0.0
  %1132 = vmatmul.mubr.f32.gmra.mrb[0].mxu0 %v978
  %v1133 = vpop.f32.mrb[0].mxu0
  %v1134 = vadd.f32 0.0, %v1133
  %v1135 = vpop.f32.mrb[0].mxu0
  %1136 = vmatprep.mubr.f32.mxu0 0.0
  %1137 = vmatmul.mubr.f32.gmra.mrb[0].mxu0 %v979
  %v1138 = vpop.f32.mrb[0].mxu0
  %v1139 = vadd.f32 0.0, %v1138
  %v1140 = vpop.f32.mrb[0].mxu0
  %1141 = vdwg.mxu0
  %v1142 = vadd.f32 %v886, %v1064
  %v1143 = vadd.f32 %v891, %v1069
  %v1144 = vadd.f32 %v896, %v1074
  %v1145 = vadd.f32 %v901, %v1079
  %v1146 = vadd.f32 %v906, %v1084
  %v1147 = vadd.f32 %v911, %v1089
  %v1148 = vadd.f32 %v916, %v1094
  %v1149 = vadd.f32 %v921, %v1099
  %v1150 = vadd.f32 %v926, %v1104
  %v1151 = vadd.f32 %v931, %v1109
  %v1152 = vadd.f32 %v936, %v1114
  %v1153 = vadd.f32 %v941, %v1119
  %v1154 = vadd.f32 %v946, %v1124
  %v1155 = vadd.f32 %v951, %v1129
  %v1156 = vadd.f32 %v956, %v1134
  %v1157 = vadd.f32 %v961, %v1139
  %v1158 = vld [vmem:[#allocation2 + $0x30] sm:$0xff]
  %v1159 = vld [vmem:[#allocation2 + $0x38] sm:$0xff]
  %v1160 = vld [vmem:[#allocation2 + $0x40] sm:$0xff]
  %v1161 = vld [vmem:[#allocation2 + $0x48] sm:$0xff]
  %v1162 = vld [vmem:[#allocation2 + $0x50] sm:$0xff]
  %v1163 = vld [vmem:[#allocation2 + $0x58] sm:$0xff]
  %v1164 = vld [vmem:[#allocation2 + $0x60] sm:$0xff]
  %v1165 = vld [vmem:[#allocation2 + $0x68] sm:$0xff]
  %v1166 = vld [vmem:[#allocation2 + $0x70] sm:$0xff]
  %v1167 = vld [vmem:[#allocation2 + $0x78] sm:$0xff]
  %v1168 = vld [vmem:[#allocation2 + $0x80] sm:$0xff]
  %v1169 = vld [vmem:[#allocation2 + $0x88] sm:$0xff]
  %v1170 = vld [vmem:[#allocation2 + $0x90] sm:$0xff]
  %v1171 = vld [vmem:[#allocation2 + $0x98] sm:$0xff]
  %v1172 = vld [vmem:[#allocation2 + $0xa0] sm:$0xff]
  %v1173 = vld [vmem:[#allocation2 + $0xa8] sm:$0xff]
  %s1174 = scalar_lea.vmem %s3, 384
  %v1175 = vld [vmem:[%s1174] sm:$0xff]
  %v1176 = vld [vmem:[%s1174 + $0x8] sm:$0xff]
  %v1177 = vld [vmem:[%s1174 + $0x10] sm:$0xff]
  %v1178 = vld [vmem:[%s1174 + $0x18] sm:$0xff]
  %v1179 = vld [vmem:[%s1174 + $0x20] sm:$0xff]
  %v1180 = vld [vmem:[%s1174 + $0x28] sm:$0xff]
  %v1181 = vld [vmem:[%s1174 + $0x30] sm:$0xff]
  %v1182 = vld [vmem:[%s1174 + $0x38] sm:$0xff]
  %v1183 = vld [vmem:[%s1174 + $0x40] sm:$0xff]
  %v1184 = vld [vmem:[%s1174 + $0x48] sm:$0xff]
  %v1185 = vld [vmem:[%s1174 + $0x50] sm:$0xff]
  %v1186 = vld [vmem:[%s1174 + $0x58] sm:$0xff]
  %v1187 = vld [vmem:[%s1174 + $0x60] sm:$0xff]
  %v1188 = vld [vmem:[%s1174 + $0x68] sm:$0xff]
  %v1189 = vld [vmem:[%s1174 + $0x70] sm:$0xff]
  %v1190 = vld [vmem:[%s1174 + $0x78] sm:$0xff]
  %1191 = vmatprep.subr.mxu0 0.0
  %1192 = vmatpush1.msra.mxu0 %v1175
  %1193 = vmatprep.subr.mxu0 0.0
  %1194 = vmatpush1.msra.mxu0 %v1176
  %1195 = vmatprep.subr.mxu0 0.0
  %1196 = vmatpush1.msra.mxu0 %v1177
  %1197 = vmatprep.subr.mxu0 0.0
  %1198 = vmatpush1.msra.mxu0 %v1178
  %1199 = vmatprep.subr.mxu0 0.0
  %1200 = vmatpush1.msra.mxu0 %v1179
  %1201 = vmatprep.subr.mxu0 0.0
  %1202 = vmatpush1.msra.mxu0 %v1180
  %1203 = vmatprep.subr.mxu0 0.0
  %1204 = vmatpush1.msra.mxu0 %v1181
  %1205 = vmatprep.subr.mxu0 0.0
  %1206 = vmatpush1.msra.mxu0 %v1182
  %1207 = vmatprep.subr.mxu0 0.0
  %1208 = vmatpush1.msra.mxu0 %v1183
  %1209 = vmatprep.subr.mxu0 0.0
  %1210 = vmatpush1.msra.mxu0 %v1184
  %1211 = vmatprep.subr.mxu0 0.0
  %1212 = vmatpush1.msra.mxu0 %v1185
  %1213 = vmatprep.subr.mxu0 0.0
  %1214 = vmatpush1.msra.mxu0 %v1186
  %1215 = vmatprep.subr.mxu0 0.0
  %1216 = vmatpush1.msra.mxu0 %v1187
  %1217 = vmatprep.subr.mxu0 0.0
  %1218 = vmatpush1.msra.mxu0 %v1188
  %1219 = vmatprep.subr.mxu0 0.0
  %1220 = vmatpush1.msra.mxu0 %v1189
  %1221 = vmatprep.subr.mxu0 0.0
  %1222 = vmatpush1.msra.mxu0 %v1190
  %1223 = vmatprep.subr.mxu0 0.0
  %1224 = vmatpush1.msra.mxu0 0.0
  %1225 = vmatprep.subr.mxu0 0.0
  %1226 = vmatpush1.msra.mxu0 0.0
  %1227 = vmatprep.subr.mxu0 0.0
  %1228 = vmatpush1.msra.mxu0 0.0
  %1229 = vmatprep.subr.mxu0 0.0
  %1230 = vmatpush1.msra.mxu0 0.0
  %1231 = vmatprep.subr.mxu0 0.0
  %1232 = vmatpush1.msra.mxu0 0.0
  %1233 = vmatprep.subr.mxu0 0.0
  %1234 = vmatpush1.msra.mxu0 0.0
  %1235 = vmatprep.subr.mxu0 0.0
  %1236 = vmatpush1.msra.mxu0 0.0
  %1237 = vmatprep.subr.mxu0 0.0
  %1238 = vmatpush1.msra.mxu0 0.0
  %1239 = vmatprep.subr.mxu0 0.0
  %1240 = vmatpush1.msra.mxu0 0.0
  %1241 = vmatprep.subr.mxu0 0.0
  %1242 = vmatpush1.msra.mxu0 0.0
  %1243 = vmatprep.subr.mxu0 0.0
  %1244 = vmatpush1.msra.mxu0 0.0
  %1245 = vmatprep.subr.mxu0 0.0
  %1246 = vmatpush1.msra.mxu0 0.0
  %1247 = vmatprep.subr.mxu0 0.0
  %1248 = vmatpush1.msra.mxu0 0.0
  %1249 = vmatprep.subr.mxu0 0.0
  %1250 = vmatpush1.msra.mxu0 0.0
  %1251 = vmatprep.subr.mxu0 0.0
  %1252 = vmatpush1.msra.mxu0 0.0
  %1253 = vmatprep.subr.mxu0 0.0
  %1254 = vmatpush1.msra.mxu0 0.0
  %1255 = vmatprep.mubr.f32.mxu0 0.0
  %1256 = vmatmul.mubr.f32.gmra.mrb[0].mxu0 %v1158
  %v1257 = vpop.f32.mrb[0].mxu0
  %v1258 = vadd.f32 0.0, %v1257
  %v1259 = vpop.f32.mrb[0].mxu0
  %1260 = vmatprep.mubr.f32.mxu0 0.0
  %1261 = vmatmul.mubr.f32.gmra.mrb[0].mxu0 %v1159
  %v1262 = vpop.f32.mrb[0].mxu0
  %v1263 = vadd.f32 0.0, %v1262
  %v1264 = vpop.f32.mrb[0].mxu0
  %1265 = vmatprep.mubr.f32.mxu0 0.0
  %1266 = vmatmul.mubr.f32.gmra.mrb[0].mxu0 %v1160
  %v1267 = vpop.f32.mrb[0].mxu0
  %v1268 = vadd.f32 0.0, %v1267
  %v1269 = vpop.f32.mrb[0].mxu0
  %1270 = vmatprep.mubr.f32.mxu0 0.0
  %1271 = vmatmul.mubr.f32.gmra.mrb[0].mxu0 %v1161
  %v1272 = vpop.f32.mrb[0].mxu0
  %v1273 = vadd.f32 0.0, %v1272
  %v1274 = vpop.f32.mrb[0].mxu0
  %1275 = vmatprep.mubr.f32.mxu0 0.0
  %1276 = vmatmul.mubr.f32.gmra.mrb[0].mxu0 %v1162
  %v1277 = vpop.f32.mrb[0].mxu0
  %v1278 = vadd.f32 0.0, %v1277
  %v1279 = vpop.f32.mrb[0].mxu0
  %1280 = vmatprep.mubr.f32.mxu0 0.0
  %1281 = vmatmul.mubr.f32.gmra.mrb[0].mxu0 %v1163
  %v1282 = vpop.f32.mrb[0].mxu0
  %v1283 = vadd.f32 0.0, %v1282
  %v1284 = vpop.f32.mrb[0].mxu0
  %1285 = vmatprep.mubr.f32.mxu0 0.0
  %1286 = vmatmul.mubr.f32.gmra.mrb[0].mxu0 %v1164
  %v1287 = vpop.f32.mrb[0].mxu0
  %v1288 = vadd.f32 0.0, %v1287
  %v1289 = vpop.f32.mrb[0].mxu0
  %1290 = vmatprep.mubr.f32.mxu0 0.0
  %1291 = vmatmul.mubr.f32.gmra.mrb[0].mxu0 %v1165
  %v1292 = vpop.f32.mrb[0].mxu0
  %v1293 = vadd.f32 0.0, %v1292
  %v1294 = vpop.f32.mrb[0].mxu0
  %1295 = vmatprep.mubr.f32.mxu0 0.0
  %1296 = vmatmul.mubr.f32.gmra.mrb[0].mxu0 %v1166
  %v1297 = vpop.f32.mrb[0].mxu0
  %v1298 = vadd.f32 0.0, %v1297
  %v1299 = vpop.f32.mrb[0].mxu0
  %1300 = vmatprep.mubr.f32.mxu0 0.0
  %1301 = vmatmul.mubr.f32.gmra.mrb[0].mxu0 %v1167
  %v1302 = vpop.f32.mrb[0].mxu0
  %v1303 = vadd.f32 0.0, %v1302
  %v1304 = vpop.f32.mrb[0].mxu0
  %1305 = vmatprep.mubr.f32.mxu0 0.0
  %1306 = vmatmul.mubr.f32.gmra.mrb[0].mxu0 %v1168
  %v1307 = vpop.f32.mrb[0].mxu0
  %v1308 = vadd.f32 0.0, %v1307
  %v1309 = vpop.f32.mrb[0].mxu0
  %1310 = vmatprep.mubr.f32.mxu0 0.0
  %1311 = vmatmul.mubr.f32.gmra.mrb[0].mxu0 %v1169
  %v1312 = vpop.f32.mrb[0].mxu0
  %v1313 = vadd.f32 0.0, %v1312
  %v1314 = vpop.f32.mrb[0].mxu0
  %1315 = vmatprep.mubr.f32.mxu0 0.0
  %1316 = vmatmul.mubr.f32.gmra.mrb[0].mxu0 %v1170
  %v1317 = vpop.f32.mrb[0].mxu0
  %v1318 = vadd.f32 0.0, %v1317
  %v1319 = vpop.f32.mrb[0].mxu0
  %1320 = vmatprep.mubr.f32.mxu0 0.0
  %1321 = vmatmul.mubr.f32.gmra.mrb[0].mxu0 %v1171
  %v1322 = vpop.f32.mrb[0].mxu0
  %v1323 = vadd.f32 0.0, %v1322
  %v1324 = vpop.f32.mrb[0].mxu0
  %1325 = vmatprep.mubr.f32.mxu0 0.0
  %1326 = vmatmul.mubr.f32.gmra.mrb[0].mxu0 %v1172
  %v1327 = vpop.f32.mrb[0].mxu0
  %v1328 = vadd.f32 0.0, %v1327
  %v1329 = vpop.f32.mrb[0].mxu0
  %1330 = vmatprep.mubr.f32.mxu0 0.0
  %1331 = vmatmul.mubr.f32.gmra.mrb[0].mxu0 %v1173
  %v1332 = vpop.f32.mrb[0].mxu0
  %v1333 = vadd.f32 0.0, %v1332
  %v1334 = vpop.f32.mrb[0].mxu0
  %1335 = vdwg.mxu0
  %v1336 = vadd.f32 %v1142, %v1258
  %v1337 = vadd.f32 %v1143, %v1263
  %v1338 = vadd.f32 %v1144, %v1268
  %v1339 = vadd.f32 %v1145, %v1273
  %v1340 = vadd.f32 %v1146, %v1278
  %v1341 = vadd.f32 %v1147, %v1283
  %v1342 = vadd.f32 %v1148, %v1288
  %v1343 = vadd.f32 %v1149, %v1293
  %v1344 = vadd.f32 %v1150, %v1298
  %v1345 = vadd.f32 %v1151, %v1303
  %v1346 = vadd.f32 %v1152, %v1308
  %v1347 = vadd.f32 %v1153, %v1313
  %v1348 = vadd.f32 %v1154, %v1318
  %v1349 = vadd.f32 %v1155, %v1323
  %v1350 = vadd.f32 %v1156, %v1328
  %v1351 = vadd.f32 %v1157, %v1333
  %v1352 = vld [vmem:[#allocation2 + $0x40] sm:$0xff]
  %v1353 = vld [vmem:[#allocation2 + $0x48] sm:$0xff]
  %v1354 = vld [vmem:[#allocation2 + $0x50] sm:$0xff]
  %v1355 = vld [vmem:[#allocation2 + $0x58] sm:$0xff]
  %v1356 = vld [vmem:[#allocation2 + $0x60] sm:$0xff]
  %v1357 = vld [vmem:[#allocation2 + $0x68] sm:$0xff]
  %v1358 = vld [vmem:[#allocation2 + $0x70] sm:$0xff]
  %v1359 = vld [vmem:[#allocation2 + $0x78] sm:$0xff]
  %v1360 = vld [vmem:[#allocation2 + $0x80] sm:$0xff]
  %v1361 = vld [vmem:[#allocation2 + $0x88] sm:$0xff]
  %v1362 = vld [vmem:[#allocation2 + $0x90] sm:$0xff]
  %v1363 = vld [vmem:[#allocation2 + $0x98] sm:$0xff]
  %v1364 = vld [vmem:[#allocation2 + $0xa0] sm:$0xff]
  %v1365 = vld [vmem:[#allocation2 + $0xa8] sm:$0xff]
  %v1366 = vld [vmem:[#allocation2 + $0xb0] sm:$0xff]
  %v1367 = vld [vmem:[#allocation2 + $0xb8] sm:$0xff]
  %s1368 = scalar_lea.vmem %s3, 512
  %v1369 = vld [vmem:[%s1368] sm:$0xff]
  %v1370 = vld [vmem:[%s1368 + $0x8] sm:$0xff]
  %v1371 = vld [vmem:[%s1368 + $0x10] sm:$0xff]
  %v1372 = vld [vmem:[%s1368 + $0x18] sm:$0xff]
  %v1373 = vld [vmem:[%s1368 + $0x20] sm:$0xff]
  %v1374 = vld [vmem:[%s1368 + $0x28] sm:$0xff]
  %v1375 = vld [vmem:[%s1368 + $0x30] sm:$0xff]
  %v1376 = vld [vmem:[%s1368 + $0x38] sm:$0xff]
  %v1377 = vld [vmem:[%s1368 + $0x40] sm:$0xff]
  %v1378 = vld [vmem:[%s1368 + $0x48] sm:$0xff]
  %v1379 = vld [vmem:[%s1368 + $0x50] sm:$0xff]
  %v1380 = vld [vmem:[%s1368 + $0x58] sm:$0xff]
  %v1381 = vld [vmem:[%s1368 + $0x60] sm:$0xff]
  %v1382 = vld [vmem:[%s1368 + $0x68] sm:$0xff]
  %v1383 = vld [vmem:[%s1368 + $0x70] sm:$0xff]
  %v1384 = vld [vmem:[%s1368 + $0x78] sm:$0xff]
  %1385 = vmatprep.subr.mxu0 0.0
  %1386 = vmatpush1.msra.mxu0 %v1369
  %1387 = vmatprep.subr.mxu0 0.0
  %1388 = vmatpush1.msra.mxu0 %v1370
  %1389 = vmatprep.subr.mxu0 0.0
  %1390 = vmatpush1.msra.mxu0 %v1371
  %1391 = vmatprep.subr.mxu0 0.0
  %1392 = vmatpush1.msra.mxu0 %v1372
  %1393 = vmatprep.subr.mxu0 0.0
  %1394 = vmatpush1.msra.mxu0 %v1373
  %1395 = vmatprep.subr.mxu0 0.0
  %1396 = vmatpush1.msra.mxu0 %v1374
  %1397 = vmatprep.subr.mxu0 0.0
  %1398 = vmatpush1.msra.mxu0 %v1375
  %1399 = vmatprep.subr.mxu0 0.0
  %1400 = vmatpush1.msra.mxu0 %v1376
  %1401 = vmatprep.subr.mxu0 0.0
  %1402 = vmatpush1.msra.mxu0 %v1377
  %1403 = vmatprep.subr.mxu0 0.0
  %1404 = vmatpush1.msra.mxu0 %v1378
  %1405 = vmatprep.subr.mxu0 0.0
  %1406 = vmatpush1.msra.mxu0 %v1379
  %1407 = vmatprep.subr.mxu0 0.0
  %1408 = vmatpush1.msra.mxu0 %v1380
  %1409 = vmatprep.subr.mxu0 0.0
  %1410 = vmatpush1.msra.mxu0 %v1381
  %1411 = vmatprep.subr.mxu0 0.0
  %1412 = vmatpush1.msra.mxu0 %v1382
  %1413 = vmatprep.subr.mxu0 0.0
  %1414 = vmatpush1.msra.mxu0 %v1383
  %1415 = vmatprep.subr.mxu0 0.0
  %1416 = vmatpush1.msra.mxu0 %v1384
  %1417 = vmatprep.subr.mxu0 0.0
  %1418 = vmatpush1.msra.mxu0 0.0
  %1419 = vmatprep.subr.mxu0 0.0
  %1420 = vmatpush1.msra.mxu0 0.0
  %1421 = vmatprep.subr.mxu0 0.0
  %1422 = vmatpush1.msra.mxu0 0.0
  %1423 = vmatprep.subr.mxu0 0.0
  %1424 = vmatpush1.msra.mxu0 0.0
  %1425 = vmatprep.subr.mxu0 0.0
  %1426 = vmatpush1.msra.mxu0 0.0
  %1427 = vmatprep.subr.mxu0 0.0
  %1428 = vmatpush1.msra.mxu0 0.0
  %1429 = vmatprep.subr.mxu0 0.0
  %1430 = vmatpush1.msra.mxu0 0.0
  %1431 = vmatprep.subr.mxu0 0.0
  %1432 = vmatpush1.msra.mxu0 0.0
  %1433 = vmatprep.subr.mxu0 0.0
  %1434 = vmatpush1.msra.mxu0 0.0
  %1435 = vmatprep.subr.mxu0 0.0
  %1436 = vmatpush1.msra.mxu0 0.0
  %1437 = vmatprep.subr.mxu0 0.0
  %1438 = vmatpush1.msra.mxu0 0.0
  %1439 = vmatprep.subr.mxu0 0.0
  %1440 = vmatpush1.msra.mxu0 0.0
  %1441 = vmatprep.subr.mxu0 0.0
  %1442 = vmatpush1.msra.mxu0 0.0
  %1443 = vmatprep.subr.mxu0 0.0
  %1444 = vmatpush1.msra.mxu0 0.0
  %1445 = vmatprep.subr.mxu0 0.0
  %1446 = vmatpush1.msra.mxu0 0.0
  %1447 = vmatprep.subr.mxu0 0.0
  %1448 = vmatpush1.msra.mxu0 0.0
  %1449 = vmatprep.mubr.f32.mxu0 0.0
  %1450 = vmatmul.mubr.f32.gmra.mrb[0].mxu0 %v1352
  %v1451 = vpop.f32.mrb[0].mxu0
  %v1452 = vadd.f32 0.0, %v1451
  %v1453 = vpop.f32.mrb[0].mxu0
  %1454 = vmatprep.mubr.f32.mxu0 0.0
  %1455 = vmatmul.mubr.f32.gmra.mrb[0].mxu0 %v1353
  %v1456 = vpop.f32.mrb[0].mxu0
  %v1457 = vadd.f32 0.0, %v1456
  %v1458 = vpop.f32.mrb[0].mxu0
  %1459 = vmatprep.mubr.f32.mxu0 0.0
  %1460 = vmatmul.mubr.f32.gmra.mrb[0].mxu0 %v1354
  %v1461 = vpop.f32.mrb[0].mxu0
  %v1462 = vadd.f32 0.0, %v1461
  %v1463 = vpop.f32.mrb[0].mxu0
  %1464 = vmatprep.mubr.f32.mxu0 0.0
  %1465 = vmatmul.mubr.f32.gmra.mrb[0].mxu0 %v1355
  %v1466 = vpop.f32.mrb[0].mxu0
  %v1467 = vadd.f32 0.0, %v1466
  %v1468 = vpop.f32.mrb[0].mxu0
  %1469 = vmatprep.mubr.f32.mxu0 0.0
  %1470 = vmatmul.mubr.f32.gmra.mrb[0].mxu0 %v1356
  %v1471 = vpop.f32.mrb[0].mxu0
  %v1472 = vadd.f32 0.0, %v1471
  %v1473 = vpop.f32.mrb[0].mxu0
  %1474 = vmatprep.mubr.f32.mxu0 0.0
  %1475 = vmatmul.mubr.f32.gmra.mrb[0].mxu0 %v1357
  %v1476 = vpop.f32.mrb[0].mxu0
  %v1477 = vadd.f32 0.0, %v1476
  %v1478 = vpop.f32.mrb[0].mxu0
  %1479 = vmatprep.mubr.f32.mxu0 0.0
  %1480 = vmatmul.mubr.f32.gmra.mrb[0].mxu0 %v1358
  %v1481 = vpop.f32.mrb[0].mxu0
  %v1482 = vadd.f32 0.0, %v1481
  %v1483 = vpop.f32.mrb[0].mxu0
  %1484 = vmatprep.mubr.f32.mxu0 0.0
  %1485 = vmatmul.mubr.f32.gmra.mrb[0].mxu0 %v1359
  %v1486 = vpop.f32.mrb[0].mxu0
  %v1487 = vadd.f32 0.0, %v1486
  %v1488 = vpop.f32.mrb[0].mxu0
  %1489 = vmatprep.mubr.f32.mxu0 0.0
  %1490 = vmatmul.mubr.f32.gmra.mrb[0].mxu0 %v1360
  %v1491 = vpop.f32.mrb[0].mxu0
  %v1492 = vadd.f32 0.0, %v1491
  %v1493 = vpop.f32.mrb[0].mxu0
  %1494 = vmatprep.mubr.f32.mxu0 0.0
  %1495 = vmatmul.mubr.f32.gmra.mrb[0].mxu0 %v1361
  %v1496 = vpop.f32.mrb[0].mxu0
  %v1497 = vadd.f32 0.0, %v1496
  %v1498 = vpop.f32.mrb[0].mxu0
  %1499 = vmatprep.mubr.f32.mxu0 0.0
  %1500 = vmatmul.mubr.f32.gmra.mrb[0].mxu0 %v1362
  %v1501 = vpop.f32.mrb[0].mxu0
  %v1502 = vadd.f32 0.0, %v1501
  %v1503 = vpop.f32.mrb[0].mxu0
  %1504 = vmatprep.mubr.f32.mxu0 0.0
  %1505 = vmatmul.mubr.f32.gmra.mrb[0].mxu0 %v1363
  %v1506 = vpop.f32.mrb[0].mxu0
  %v1507 = vadd.f32 0.0, %v1506
  %v1508 = vpop.f32.mrb[0].mxu0
  %1509 = vmatprep.mubr.f32.mxu0 0.0
  %1510 = vmatmul.mubr.f32.gmra.mrb[0].mxu0 %v1364
  %v1511 = vpop.f32.mrb[0].mxu0
  %v1512 = vadd.f32 0.0, %v1511
  %v1513 = vpop.f32.mrb[0].mxu0
  %1514 = vmatprep.mubr.f32.mxu0 0.0
  %1515 = vmatmul.mubr.f32.gmra.mrb[0].mxu0 %v1365
  %v1516 = vpop.f32.mrb[0].mxu0
  %v1517 = vadd.f32 0.0, %v1516
  %v1518 = vpop.f32.mrb[0].mxu0
  %1519 = vmatprep.mubr.f32.mxu0 0.0
  %1520 = vmatmul.mubr.f32.gmra.mrb[0].mxu0 %v1366
  %v1521 = vpop.f32.mrb[0].mxu0
  %v1522 = vadd.f32 0.0, %v1521
  %v1523 = vpop.f32.mrb[0].mxu0
  %1524 = vmatprep.mubr.f32.mxu0 0.0
  %1525 = vmatmul.mubr.f32.gmra.mrb[0].mxu0 %v1367
  %v1526 = vpop.f32.mrb[0].mxu0
  %v1527 = vadd.f32 0.0, %v1526
  %v1528 = vpop.f32.mrb[0].mxu0
  %1529 = vdwg.mxu0
  %v1530 = vadd.f32 %v1336, %v1452
  %v1531 = vadd.f32 %v1337, %v1457
  %v1532 = vadd.f32 %v1338, %v1462
  %v1533 = vadd.f32 %v1339, %v1467
  %v1534 = vadd.f32 %v1340, %v1472
  %v1535 = vadd.f32 %v1341, %v1477
  %v1536 = vadd.f32 %v1342, %v1482
  %v1537 = vadd.f32 %v1343, %v1487
  %v1538 = vadd.f32 %v1344, %v1492
  %v1539 = vadd.f32 %v1345, %v1497
  %v1540 = vadd.f32 %v1346, %v1502
  %v1541 = vadd.f32 %v1347, %v1507
  %v1542 = vadd.f32 %v1348, %v1512
  %v1543 = vadd.f32 %v1349, %v1517
  %v1544 = vadd.f32 %v1350, %v1522
  %v1545 = vadd.f32 %v1351, %v1527
  %v1547 = vlaneseq
  %v1548 = vshrl.u32 %v1547, 7
  %v1549 = vsub.s32 0, %v1548
  %v1550 = vrot.slane %v622, %v1549
  %v1552 = vadd.f32 %v1530, %v1550
  %v1553 = vadd.f32 %v1531, %v1550
  %v1554 = vadd.f32 %v1532, %v1550
  %v1555 = vadd.f32 %v1533, %v1550
  %v1556 = vadd.f32 %v1534, %v1550
  %v1557 = vadd.f32 %v1535, %v1550
  %v1558 = vadd.f32 %v1536, %v1550
  %v1559 = vadd.f32 %v1537, %v1550
  %v1560 = vadd.f32 %v1538, %v1550
  %v1561 = vadd.f32 %v1539, %v1550
  %v1562 = vadd.f32 %v1540, %v1550
  %v1563 = vadd.f32 %v1541, %v1550
  %v1564 = vadd.f32 %v1542, %v1550
  %v1565 = vadd.f32 %v1543, %v1550
  %v1566 = vadd.f32 %v1544, %v1550
  %v1567 = vadd.f32 %v1545, %v1550
  %v1568 = vmax.f32 %v1552, 0.0
  %v1569 = vmax.f32 %v1553, 0.0
  %v1570 = vmax.f32 %v1554, 0.0
  %v1571 = vmax.f32 %v1555, 0.0
  %v1572 = vmax.f32 %v1556, 0.0
  %v1573 = vmax.f32 %v1557, 0.0
  %v1574 = vmax.f32 %v1558, 0.0
  %v1575 = vmax.f32 %v1559, 0.0
  %v1576 = vmax.f32 %v1560, 0.0
  %v1577 = vmax.f32 %v1561, 0.0
  %v1578 = vmax.f32 %v1562, 0.0
  %v1579 = vmax.f32 %v1563, 0.0
  %v1580 = vmax.f32 %v1564, 0.0
  %v1581 = vmax.f32 %v1565, 0.0
  %v1582 = vmax.f32 %v1566, 0.0
  %v1583 = vmax.f32 %v1567, 0.0
  %1584 = vst [vmem:[%s5] sm:$0xff] %v1568
  %1585 = vst [vmem:[%s5 + $0x8] sm:$0xff] %v1569
  %1586 = vst [vmem:[%s5 + $0x10] sm:$0xff] %v1570
  %1587 = vst [vmem:[%s5 + $0x18] sm:$0xff] %v1571
  %1588 = vst [vmem:[%s5 + $0x20] sm:$0xff] %v1572
  %1589 = vst [vmem:[%s5 + $0x28] sm:$0xff] %v1573
  %1590 = vst [vmem:[%s5 + $0x30] sm:$0xff] %v1574
  %1591 = vst [vmem:[%s5 + $0x38] sm:$0xff] %v1575
  %1592 = vst [vmem:[%s5 + $0x40] sm:$0xff] %v1576
  %1593 = vst [vmem:[%s5 + $0x48] sm:$0xff] %v1577
  %1594 = vst [vmem:[%s5 + $0x50] sm:$0xff] %v1578
  %1595 = vst [vmem:[%s5 + $0x58] sm:$0xff] %v1579
  %1596 = vst [vmem:[%s5 + $0x60] sm:$0xff] %v1580
  %1597 = vst [vmem:[%s5 + $0x68] sm:$0xff] %v1581
  %1598 = vst [vmem:[%s5 + $0x70] sm:$0xff] %v1582
  %1599 = vst [vmem:[%s5 + $0x78] sm:$0xff] %v1583
  %v1600 = vld [vmem:[#allocation2 + $0xc0] sm:$0xff]
  %v1601 = vld [vmem:[#allocation2 + $0xc8] sm:$0xff]
  %v1602 = vld [vmem:[#allocation2 + $0xd0] sm:$0xff]
  %v1603 = vld [vmem:[#allocation2 + $0xd8] sm:$0xff]
  %v1604 = vld [vmem:[#allocation2 + $0xe0] sm:$0xff]
  %v1605 = vld [vmem:[#allocation2 + $0xe8] sm:$0xff]
  %v1606 = vld [vmem:[#allocation2 + $0xf0] sm:$0xff]
  %v1607 = vld [vmem:[#allocation2 + $0xf8] sm:$0xff]
  %v1608 = vld [vmem:[#allocation2 + $0x100] sm:$0xff]
  %v1609 = vld [vmem:[#allocation2 + $0x108] sm:$0xff]
  %v1610 = vld [vmem:[#allocation2 + $0x110] sm:$0xff]
  %v1611 = vld [vmem:[#allocation2 + $0x118] sm:$0xff]
  %v1612 = vld [vmem:[#allocation2 + $0x120] sm:$0xff]
  %v1613 = vld [vmem:[#allocation2 + $0x128] sm:$0xff]
  %v1614 = vld [vmem:[#allocation2 + $0x130] sm:$0xff]
  %v1615 = vld [vmem:[#allocation2 + $0x138] sm:$0xff]
  %v1616 = vld [vmem:[%s3] sm:$0xff]
  %v1617 = vld [vmem:[%s3 + $0x8] sm:$0xff]
  %v1618 = vld [vmem:[%s3 + $0x10] sm:$0xff]
  %v1619 = vld [vmem:[%s3 + $0x18] sm:$0xff]
  %v1620 = vld [vmem:[%s3 + $0x20] sm:$0xff]
  %v1621 = vld [vmem:[%s3 + $0x28] sm:$0xff]
  %v1622 = vld [vmem:[%s3 + $0x30] sm:$0xff]
  %v1623 = vld [vmem:[%s3 + $0x38] sm:$0xff]
  %v1624 = vld [vmem:[%s3 + $0x40] sm:$0xff]
  %v1625 = vld [vmem:[%s3 + $0x48] sm:$0xff]
  %v1626 = vld [vmem:[%s3 + $0x50] sm:$0xff]
  %v1627 = vld [vmem:[%s3 + $0x58] sm:$0xff]
  %v1628 = vld [vmem:[%s3 + $0x60] sm:$0xff]
  %v1629 = vld [vmem:[%s3 + $0x68] sm:$0xff]
  %v1630 = vld [vmem:[%s3 + $0x70] sm:$0xff]
  %v1631 = vld [vmem:[%s3 + $0x78] sm:$0xff]
  %v1632 = vld [vmem:[#allocation2 + $0x140] sm:$0xff]
  %v1633 = vld [vmem:[#allocation2 + $0x148] sm:$0xff]
  %v1634 = vld [vmem:[%s657] sm:$0xff]
  %v1635 = vld [vmem:[%s657 + $0x8] sm:$0xff]
  %v1636 = vld [vmem:[%s657 + $0x10] sm:$0xff]
  %v1637 = vld [vmem:[%s657 + $0x18] sm:$0xff]
  %v1638 = vld [vmem:[%s657 + $0x20] sm:$0xff]
  %v1639 = vld [vmem:[%s657 + $0x28] sm:$0xff]
  %v1640 = vld [vmem:[%s657 + $0x30] sm:$0xff]
  %v1641 = vld [vmem:[%s657 + $0x38] sm:$0xff]
  %v1642 = vld [vmem:[%s657 + $0x40] sm:$0xff]
  %v1643 = vld [vmem:[%s657 + $0x48] sm:$0xff]
  %v1644 = vld [vmem:[%s657 + $0x50] sm:$0xff]
  %v1645 = vld [vmem:[%s657 + $0x58] sm:$0xff]
  %v1646 = vld [vmem:[%s657 + $0x60] sm:$0xff]
  %v1647 = vld [vmem:[%s657 + $0x68] sm:$0xff]
  %v1648 = vld [vmem:[%s657 + $0x70] sm:$0xff]
  %v1649 = vld [vmem:[%s657 + $0x78] sm:$0xff]
  %1650 = vmatprep.subr.mxu0 0.0
  %1651 = vmatpush1.msra.mxu0 %v1634
  %1652 = vmatprep.subr.mxu0 0.0
  %1653 = vmatpush1.msra.mxu0 %v1635
  %1654 = vmatprep.subr.mxu0 0.0
  %1655 = vmatpush1.msra.mxu0 %v1636
  %1656 = vmatprep.subr.mxu0 0.0
  %1657 = vmatpush1.msra.mxu0 %v1637
  %1658 = vmatprep.subr.mxu0 0.0
  %1659 = vmatpush1.msra.mxu0 %v1638
  %1660 = vmatprep.subr.mxu0 0.0
  %1661 = vmatpush1.msra.mxu0 %v1639
  %1662 = vmatprep.subr.mxu0 0.0
  %1663 = vmatpush1.msra.mxu0 %v1640
  %1664 = vmatprep.subr.mxu0 0.0
  %1665 = vmatpush1.msra.mxu0 %v1641
  %1666 = vmatprep.subr.mxu0 0.0
  %1667 = vmatpush1.msra.mxu0 %v1642
  %1668 = vmatprep.subr.mxu0 0.0
  %1669 = vmatpush1.msra.mxu0 %v1643
  %1670 = vmatprep.subr.mxu0 0.0
  %1671 = vmatpush1.msra.mxu0 %v1644
  %1672 = vmatprep.subr.mxu0 0.0
  %1673 = vmatpush1.msra.mxu0 %v1645
  %1674 = vmatprep.subr.mxu0 0.0
  %1675 = vmatpush1.msra.mxu0 %v1646
  %1676 = vmatprep.subr.mxu0 0.0
  %1677 = vmatpush1.msra.mxu0 %v1647
  %1678 = vmatprep.subr.mxu0 0.0
  %1679 = vmatpush1.msra.mxu0 %v1648
  %1680 = vmatprep.subr.mxu0 0.0
  %1681 = vmatpush1.msra.mxu0 %v1649
  %1682 = vmatprep.subr.mxu0 0.0
  %1683 = vmatpush1.msra.mxu0 0.0
  %1684 = vmatprep.subr.mxu0 0.0
  %1685 = vmatpush1.msra.mxu0 0.0
  %1686 = vmatprep.subr.mxu0 0.0
  %1687 = vmatpush1.msra.mxu0 0.0
  %1688 = vmatprep.subr.mxu0 0.0
  %1689 = vmatpush1.msra.mxu0 0.0
  %1690 = vmatprep.subr.mxu0 0.0
  %1691 = vmatpush1.msra.mxu0 0.0
  %1692 = vmatprep.subr.mxu0 0.0
  %1693 = vmatpush1.msra.mxu0 0.0
  %1694 = vmatprep.subr.mxu0 0.0
  %1695 = vmatpush1.msra.mxu0 0.0
  %1696 = vmatprep.subr.mxu0 0.0
  %1697 = vmatpush1.msra.mxu0 0.0
  %1698 = vmatprep.subr.mxu0 0.0
  %1699 = vmatpush1.msra.mxu0 0.0
  %1700 = vmatprep.subr.mxu0 0.0
  %1701 = vmatpush1.msra.mxu0 0.0
  %1702 = vmatprep.subr.mxu0 0.0
  %1703 = vmatpush1.msra.mxu0 0.0
  %1704 = vmatprep.subr.mxu0 0.0
  %1705 = vmatpush1.msra.mxu0 0.0
  %1706 = vmatprep.subr.mxu0 0.0
  %1707 = vmatpush1.msra.mxu0 0.0
  %1708 = vmatprep.subr.mxu0 0.0
  %1709 = vmatpush1.msra.mxu0 0.0
  %1710 = vmatprep.subr.mxu0 0.0
  %1711 = vmatpush1.msra.mxu0 0.0
  %1712 = vmatprep.subr.mxu0 0.0
  %1713 = vmatpush1.msra.mxu0 0.0
  %1714 = vmatprep.mubr.f32.mxu0 0.0
  %1715 = vmatmul.mubr.f32.gmra.mrb[0].mxu0 %v1602
  %v1716 = vpop.f32.mrb[0].mxu0
  %v1717 = vadd.f32 0.0, %v1716
  %v1718 = vpop.f32.mrb[0].mxu0
  %1719 = vmatprep.mubr.f32.mxu0 0.0
  %1720 = vmatmul.mubr.f32.gmra.mrb[0].mxu0 %v1603
  %v1721 = vpop.f32.mrb[0].mxu0
  %v1722 = vadd.f32 0.0, %v1721
  %v1723 = vpop.f32.mrb[0].mxu0
  %1724 = vmatprep.mubr.f32.mxu0 0.0
  %1725 = vmatmul.mubr.f32.gmra.mrb[0].mxu0 %v1604
  %v1726 = vpop.f32.mrb[0].mxu0
  %v1727 = vadd.f32 0.0, %v1726
  %v1728 = vpop.f32.mrb[0].mxu0
  %1729 = vmatprep.mubr.f32.mxu0 0.0
  %1730 = vmatmul.mubr.f32.gmra.mrb[0].mxu0 %v1605
  %v1731 = vpop.f32.mrb[0].mxu0
  %v1732 = vadd.f32 0.0, %v1731
  %v1733 = vpop.f32.mrb[0].mxu0
  %1734 = vmatprep.mubr.f32.mxu0 0.0
  %1735 = vmatmul.mubr.f32.gmra.mrb[0].mxu0 %v1606
  %v1736 = vpop.f32.mrb[0].mxu0
  %v1737 = vadd.f32 0.0, %v1736
  %v1738 = vpop.f32.mrb[0].mxu0
  %1739 = vmatprep.mubr.f32.mxu0 0.0
  %1740 = vmatmul.mubr.f32.gmra.mrb[0].mxu0 %v1607
  %v1741 = vpop.f32.mrb[0].mxu0
  %v1742 = vadd.f32 0.0, %v1741
  %v1743 = vpop.f32.mrb[0].mxu0
  %1744 = vmatprep.mubr.f32.mxu0 0.0
  %1745 = vmatmul.mubr.f32.gmra.mrb[0].mxu0 %v1608
  %v1746 = vpop.f32.mrb[0].mxu0
  %v1747 = vadd.f32 0.0, %v1746
  %v1748 = vpop.f32.mrb[0].mxu0
  %1749 = vmatprep.mubr.f32.mxu0 0.0
  %1750 = vmatmul.mubr.f32.gmra.mrb[0].mxu0 %v1609
  %v1751 = vpop.f32.mrb[0].mxu0
  %v1752 = vadd.f32 0.0, %v1751
  %v1753 = vpop.f32.mrb[0].mxu0
  %1754 = vmatprep.mubr.f32.mxu0 0.0
  %1755 = vmatmul.mubr.f32.gmra.mrb[0].mxu0 %v1610
  %v1756 = vpop.f32.mrb[0].mxu0
  %v1757 = vadd.f32 0.0, %v1756
  %v1758 = vpop.f32.mrb[0].mxu0
  %1759 = vmatprep.mubr.f32.mxu0 0.0
  %1760 = vmatmul.mubr.f32.gmra.mrb[0].mxu0 %v1611
  %v1761 = vpop.f32.mrb[0].mxu0
  %v1762 = vadd.f32 0.0, %v1761
  %v1763 = vpop.f32.mrb[0].mxu0
  %1764 = vmatprep.mubr.f32.mxu0 0.0
  %1765 = vmatmul.mubr.f32.gmra.mrb[0].mxu0 %v1612
  %v1766 = vpop.f32.mrb[0].mxu0
  %v1767 = vadd.f32 0.0, %v1766
  %v1768 = vpop.f32.mrb[0].mxu0
  %1769 = vmatprep.mubr.f32.mxu0 0.0
  %1770 = vmatmul.mubr.f32.gmra.mrb[0].mxu0 %v1613
  %v1771 = vpop.f32.mrb[0].mxu0
  %v1772 = vadd.f32 0.0, %v1771
  %v1773 = vpop.f32.mrb[0].mxu0
  %1774 = vmatprep.mubr.f32.mxu0 0.0
  %1775 = vmatmul.mubr.f32.gmra.mrb[0].mxu0 %v1614
  %v1776 = vpop.f32.mrb[0].mxu0
  %v1777 = vadd.f32 0.0, %v1776
  %v1778 = vpop.f32.mrb[0].mxu0
  %1779 = vmatprep.mubr.f32.mxu0 0.0
  %1780 = vmatmul.mubr.f32.gmra.mrb[0].mxu0 %v1615
  %v1781 = vpop.f32.mrb[0].mxu0
  %v1782 = vadd.f32 0.0, %v1781
  %v1783 = vpop.f32.mrb[0].mxu0
  %1784 = vmatprep.mubr.f32.mxu0 0.0
  %1785 = vmatmul.mubr.f32.gmra.mrb[0].mxu0 %v1632
  %v1786 = vpop.f32.mrb[0].mxu0
  %v1787 = vadd.f32 0.0, %v1786
  %v1788 = vpop.f32.mrb[0].mxu0
  %1789 = vmatprep.mubr.f32.mxu0 0.0
  %1790 = vmatmul.mubr.f32.gmra.mrb[0].mxu0 %v1633
  %v1791 = vpop.f32.mrb[0].mxu0
  %v1792 = vadd.f32 0.0, %v1791
  %v1793 = vpop.f32.mrb[0].mxu0
  %1794 = vdwg.mxu0
  %1795 = vmatprep.subr.mxu0 0.0
  %1796 = vmatpush1.msra.mxu0 %v1616
  %1797 = vmatprep.subr.mxu0 0.0
  %1798 = vmatpush1.msra.mxu0 %v1617
  %1799 = vmatprep.subr.mxu0 0.0
  %1800 = vmatpush1.msra.mxu0 %v1618
  %1801 = vmatprep.subr.mxu0 0.0
  %1802 = vmatpush1.msra.mxu0 %v1619
  %1803 = vmatprep.subr.mxu0 0.0
  %1804 = vmatpush1.msra.mxu0 %v1620
  %1805 = vmatprep.subr.mxu0 0.0
  %1806 = vmatpush1.msra.mxu0 %v1621
  %1807 = vmatprep.subr.mxu0 0.0
  %1808 = vmatpush1.msra.mxu0 %v1622
  %1809 = vmatprep.subr.mxu0 0.0
  %1810 = vmatpush1.msra.mxu0 %v1623
  %1811 = vmatprep.subr.mxu0 0.0
  %1812 = vmatpush1.msra.mxu0 %v1624
  %1813 = vmatprep.subr.mxu0 0.0
  %1814 = vmatpush1.msra.mxu0 %v1625
  %1815 = vmatprep.subr.mxu0 0.0
  %1816 = vmatpush1.msra.mxu0 %v1626
  %1817 = vmatprep.subr.mxu0 0.0
  %1818 = vmatpush1.msra.mxu0 %v1627
  %1819 = vmatprep.subr.mxu0 0.0
  %1820 = vmatpush1.msra.mxu0 %v1628
  %1821 = vmatprep.subr.mxu0 0.0
  %1822 = vmatpush1.msra.mxu0 %v1629
  %1823 = vmatprep.subr.mxu0 0.0
  %1824 = vmatpush1.msra.mxu0 %v1630
  %1825 = vmatprep.subr.mxu0 0.0
  %1826 = vmatpush1.msra.mxu0 %v1631
  %1827 = vmatprep.subr.mxu0 0.0
  %1828 = vmatpush1.msra.mxu0 0.0
  %1829 = vmatprep.subr.mxu0 0.0
  %1830 = vmatpush1.msra.mxu0 0.0
  %1831 = vmatprep.subr.mxu0 0.0
  %1832 = vmatpush1.msra.mxu0 0.0
  %1833 = vmatprep.subr.mxu0 0.0
  %1834 = vmatpush1.msra.mxu0 0.0
  %1835 = vmatprep.subr.mxu0 0.0
  %1836 = vmatpush1.msra.mxu0 0.0
  %1837 = vmatprep.subr.mxu0 0.0
  %1838 = vmatpush1.msra.mxu0 0.0
  %1839 = vmatprep.subr.mxu0 0.0
  %1840 = vmatpush1.msra.mxu0 0.0
  %1841 = vmatprep.subr.mxu0 0.0
  %1842 = vmatpush1.msra.mxu0 0.0
  %1843 = vmatprep.subr.mxu0 0.0
  %1844 = vmatpush1.msra.mxu0 0.0
  %1845 = vmatprep.subr.mxu0 0.0
  %1846 = vmatpush1.msra.mxu0 0.0
  %1847 = vmatprep.subr.mxu0 0.0
  %1848 = vmatpush1.msra.mxu0 0.0
  %1849 = vmatprep.subr.mxu0 0.0
  %1850 = vmatpush1.msra.mxu0 0.0
  %1851 = vmatprep.subr.mxu0 0.0
  %1852 = vmatpush1.msra.mxu0 0.0
  %1853 = vmatprep.subr.mxu0 0.0
  %1854 = vmatpush1.msra.mxu0 0.0
  %1855 = vmatprep.subr.mxu0 0.0
  %1856 = vmatpush1.msra.mxu0 0.0
  %1857 = vmatprep.subr.mxu0 0.0
  %1858 = vmatpush1.msra.mxu0 0.0
  %1859 = vmatprep.mubr.f32.mxu0 0.0
  %1860 = vmatmul.mubr.f32.gmra.mrb[0].mxu0 %v1600
  %v1861 = vpop.f32.mrb[0].mxu0
  %v1862 = vadd.f32 %v1717, %v1861
  %v1863 = vpop.f32.mrb[0].mxu0
  %1864 = vmatprep.mubr.f32.mxu0 0.0
  %1865 = vmatmul.mubr.f32.gmra.mrb[0].mxu0 %v1601
  %v1866 = vpop.f32.mrb[0].mxu0
  %v1867 = vadd.f32 %v1722, %v1866
  %v1868 = vpop.f32.mrb[0].mxu0
  %1869 = vmatprep.mubr.f32.mxu0 0.0
  %1870 = vmatmul.mubr.f32.gmra.mrb[0].mxu0 %v1602
  %v1871 = vpop.f32.mrb[0].mxu0
  %v1872 = vadd.f32 %v1727, %v1871
  %v1873 = vpop.f32.mrb[0].mxu0
  %1874 = vmatprep.mubr.f32.mxu0 0.0
  %1875 = vmatmul.mubr.f32.gmra.mrb[0].mxu0 %v1603
  %v1876 = vpop.f32.mrb[0].mxu0
  %v1877 = vadd.f32 %v1732, %v1876
  %v1878 = vpop.f32.mrb[0].mxu0
  %1879 = vmatprep.mubr.f32.mxu0 0.0
  %1880 = vmatmul.mubr.f32.gmra.mrb[0].mxu0 %v1604
  %v1881 = vpop.f32.mrb[0].mxu0
  %v1882 = vadd.f32 %v1737, %v1881
  %v1883 = vpop.f32.mrb[0].mxu0
  %1884 = vmatprep.mubr.f32.mxu0 0.0
  %1885 = vmatmul.mubr.f32.gmra.mrb[0].mxu0 %v1605
  %v1886 = vpop.f32.mrb[0].mxu0
  %v1887 = vadd.f32 %v1742, %v1886
  %v1888 = vpop.f32.mrb[0].mxu0
  %1889 = vmatprep.mubr.f32.mxu0 0.0
  %1890 = vmatmul.mubr.f32.gmra.mrb[0].mxu0 %v1606
  %v1891 = vpop.f32.mrb[0].mxu0
  %v1892 = vadd.f32 %v1747, %v1891
  %v1893 = vpop.f32.mrb[0].mxu0
  %1894 = vmatprep.mubr.f32.mxu0 0.0
  %1895 = vmatmul.mubr.f32.gmra.mrb[0].mxu0 %v1607
  %v1896 = vpop.f32.mrb[0].mxu0
  %v1897 = vadd.f32 %v1752, %v1896
  %v1898 = vpop.f32.mrb[0].mxu0
  %1899 = vmatprep.mubr.f32.mxu0 0.0
  %1900 = vmatmul.mubr.f32.gmra.mrb[0].mxu0 %v1608
  %v1901 = vpop.f32.mrb[0].mxu0
  %v1902 = vadd.f32 %v1757, %v1901
  %v1903 = vpop.f32.mrb[0].mxu0
  %1904 = vmatprep.mubr.f32.mxu0 0.0
  %1905 = vmatmul.mubr.f32.gmra.mrb[0].mxu0 %v1609
  %v1906 = vpop.f32.mrb[0].mxu0
  %v1907 = vadd.f32 %v1762, %v1906
  %v1908 = vpop.f32.mrb[0].mxu0
  %1909 = vmatprep.mubr.f32.mxu0 0.0
  %1910 = vmatmul.mubr.f32.gmra.mrb[0].mxu0 %v1610
  %v1911 = vpop.f32.mrb[0].mxu0
  %v1912 = vadd.f32 %v1767, %v1911
  %v1913 = vpop.f32.mrb[0].mxu0
  %1914 = vmatprep.mubr.f32.mxu0 0.0
  %1915 = vmatmul.mubr.f32.gmra.mrb[0].mxu0 %v1611
  %v1916 = vpop.f32.mrb[0].mxu0
  %v1917 = vadd.f32 %v1772, %v1916
  %v1918 = vpop.f32.mrb[0].mxu0
  %1919 = vmatprep.mubr.f32.mxu0 0.0
  %1920 = vmatmul.mubr.f32.gmra.mrb[0].mxu0 %v1612
  %v1921 = vpop.f32.mrb[0].mxu0
  %v1922 = vadd.f32 %v1777, %v1921
  %v1923 = vpop.f32.mrb[0].mxu0
  %1924 = vmatprep.mubr.f32.mxu0 0.0
  %1925 = vmatmul.mubr.f32.gmra.mrb[0].mxu0 %v1613
  %v1926 = vpop.f32.mrb[0].mxu0
  %v1927 = vadd.f32 %v1782, %v1926
  %v1928 = vpop.f32.mrb[0].mxu0
  %1929 = vmatprep.mubr.f32.mxu0 0.0
  %1930 = vmatmul.mubr.f32.gmra.mrb[0].mxu0 %v1614
  %v1931 = vpop.f32.mrb[0].mxu0
  %v1932 = vadd.f32 %v1787, %v1931
  %v1933 = vpop.f32.mrb[0].mxu0
  %1934 = vmatprep.mubr.f32.mxu0 0.0
  %1935 = vmatmul.mubr.f32.gmra.mrb[0].mxu0 %v1615
  %v1936 = vpop.f32.mrb[0].mxu0
  %v1937 = vadd.f32 %v1792, %v1936
  %v1938 = vpop.f32.mrb[0].mxu0
  %1939 = vdwg.mxu0
  %v1940 = vld [vmem:[#allocation2 + $0xe0] sm:$0xff]
  %v1941 = vld [vmem:[#allocation2 + $0xe8] sm:$0xff]
  %v1942 = vld [vmem:[#allocation2 + $0xf0] sm:$0xff]
  %v1943 = vld [vmem:[#allocation2 + $0xf8] sm:$0xff]
  %v1944 = vld [vmem:[#allocation2 + $0x100] sm:$0xff]
  %v1945 = vld [vmem:[#allocation2 + $0x108] sm:$0xff]
  %v1946 = vld [vmem:[#allocation2 + $0x110] sm:$0xff]
  %v1947 = vld [vmem:[#allocation2 + $0x118] sm:$0xff]
  %v1948 = vld [vmem:[#allocation2 + $0x120] sm:$0xff]
  %v1949 = vld [vmem:[#allocation2 + $0x128] sm:$0xff]
  %v1950 = vld [vmem:[#allocation2 + $0x130] sm:$0xff]
  %v1951 = vld [vmem:[#allocation2 + $0x138] sm:$0xff]
  %v1952 = vld [vmem:[#allocation2 + $0x140] sm:$0xff]
  %v1953 = vld [vmem:[#allocation2 + $0x148] sm:$0xff]
  %v1954 = vld [vmem:[#allocation2 + $0x150] sm:$0xff]
  %v1955 = vld [vmem:[#allocation2 + $0x158] sm:$0xff]
  %v1956 = vld [vmem:[%s980] sm:$0xff]
  %v1957 = vld [vmem:[%s980 + $0x8] sm:$0xff]
  %v1958 = vld [vmem:[%s980 + $0x10] sm:$0xff]
  %v1959 = vld [vmem:[%s980 + $0x18] sm:$0xff]
  %v1960 = vld [vmem:[%s980 + $0x20] sm:$0xff]
  %v1961 = vld [vmem:[%s980 + $0x28] sm:$0xff]
  %v1962 = vld [vmem:[%s980 + $0x30] sm:$0xff]
  %v1963 = vld [vmem:[%s980 + $0x38] sm:$0xff]
  %v1964 = vld [vmem:[%s980 + $0x40] sm:$0xff]
  %v1965 = vld [vmem:[%s980 + $0x48] sm:$0xff]
  %v1966 = vld [vmem:[%s980 + $0x50] sm:$0xff]
  %v1967 = vld [vmem:[%s980 + $0x58] sm:$0xff]
  %v1968 = vld [vmem:[%s980 + $0x60] sm:$0xff]
  %v1969 = vld [vmem:[%s980 + $0x68] sm:$0xff]
  %v1970 = vld [vmem:[%s980 + $0x70] sm:$0xff]
  %v1971 = vld [vmem:[%s980 + $0x78] sm:$0xff]
  %1972 = vmatprep.subr.mxu0 0.0
  %1973 = vmatpush1.msra.mxu0 %v1956
  %1974 = vmatprep.subr.mxu0 0.0
  %1975 = vmatpush1.msra.mxu0 %v1957
  %1976 = vmatprep.subr.mxu0 0.0
  %1977 = vmatpush1.msra.mxu0 %v1958
  %1978 = vmatprep.subr.mxu0 0.0
  %1979 = vmatpush1.msra.mxu0 %v1959
  %1980 = vmatprep.subr.mxu0 0.0
  %1981 = vmatpush1.msra.mxu0 %v1960
  %1982 = vmatprep.subr.mxu0 0.0
  %1983 = vmatpush1.msra.mxu0 %v1961
  %1984 = vmatprep.subr.mxu0 0.0
  %1985 = vmatpush1.msra.mxu0 %v1962
  %1986 = vmatprep.subr.mxu0 0.0
  %1987 = vmatpush1.msra.mxu0 %v1963
  %1988 = vmatprep.subr.mxu0 0.0
  %1989 = vmatpush1.msra.mxu0 %v1964
  %1990 = vmatprep.subr.mxu0 0.0
  %1991 = vmatpush1.msra.mxu0 %v1965
  %1992 = vmatprep.subr.mxu0 0.0
  %1993 = vmatpush1.msra.mxu0 %v1966
  %1994 = vmatprep.subr.mxu0 0.0
  %1995 = vmatpush1.msra.mxu0 %v1967
  %1996 = vmatprep.subr.mxu0 0.0
  %1997 = vmatpush1.msra.mxu0 %v1968
  %1998 = vmatprep.subr.mxu0 0.0
  %1999 = vmatpush1.msra.mxu0 %v1969
  %2000 = vmatprep.subr.mxu0 0.0
  %2001 = vmatpush1.msra.mxu0 %v1970
  %2002 = vmatprep.subr.mxu0 0.0
  %2003 = vmatpush1.msra.mxu0 %v1971
  %2004 = vmatprep.subr.mxu0 0.0
  %2005 = vmatpush1.msra.mxu0 0.0
  %2006 = vmatprep.subr.mxu0 0.0
  %2007 = vmatpush1.msra.mxu0 0.0
  %2008 = vmatprep.subr.mxu0 0.0
  %2009 = vmatpush1.msra.mxu0 0.0
  %2010 = vmatprep.subr.mxu0 0.0
  %2011 = vmatpush1.msra.mxu0 0.0
  %2012 = vmatprep.subr.mxu0 0.0
  %2013 = vmatpush1.msra.mxu0 0.0
  %2014 = vmatprep.subr.mxu0 0.0
  %2015 = vmatpush1.msra.mxu0 0.0
  %2016 = vmatprep.subr.mxu0 0.0
  %2017 = vmatpush1.msra.mxu0 0.0
  %2018 = vmatprep.subr.mxu0 0.0
  %2019 = vmatpush1.msra.mxu0 0.0
  %2020 = vmatprep.subr.mxu0 0.0
  %2021 = vmatpush1.msra.mxu0 0.0
  %2022 = vmatprep.subr.mxu0 0.0
  %2023 = vmatpush1.msra.mxu0 0.0
  %2024 = vmatprep.subr.mxu0 0.0
  %2025 = vmatpush1.msra.mxu0 0.0
  %2026 = vmatprep.subr.mxu0 0.0
  %2027 = vmatpush1.msra.mxu0 0.0
  %2028 = vmatprep.subr.mxu0 0.0
  %2029 = vmatpush1.msra.mxu0 0.0
  %2030 = vmatprep.subr.mxu0 0.0
  %2031 = vmatpush1.msra.mxu0 0.0
  %2032 = vmatprep.subr.mxu0 0.0
  %2033 = vmatpush1.msra.mxu0 0.0
  %2034 = vmatprep.subr.mxu0 0.0
  %2035 = vmatpush1.msra.mxu0 0.0
  %2036 = vmatprep.mubr.f32.mxu0 0.0
  %2037 = vmatmul.mubr.f32.gmra.mrb[0].mxu0 %v1940
  %v2038 = vpop.f32.mrb[0].mxu0
  %v2039 = vadd.f32 0.0, %v2038
  %v2040 = vpop.f32.mrb[0].mxu0
  %2041 = vmatprep.mubr.f32.mxu0 0.0
  %2042 = vmatmul.mubr.f32.gmra.mrb[0].mxu0 %v1941
  %v2043 = vpop.f32.mrb[0].mxu0
  %v2044 = vadd.f32 0.0, %v2043
  %v2045 = vpop.f32.mrb[0].mxu0
  %2046 = vmatprep.mubr.f32.mxu0 0.0
  %2047 = vmatmul.mubr.f32.gmra.mrb[0].mxu0 %v1942
  %v2048 = vpop.f32.mrb[0].mxu0
  %v2049 = vadd.f32 0.0, %v2048
  %v2050 = vpop.f32.mrb[0].mxu0
  %2051 = vmatprep.mubr.f32.mxu0 0.0
  %2052 = vmatmul.mubr.f32.gmra.mrb[0].mxu0 %v1943
  %v2053 = vpop.f32.mrb[0].mxu0
  %v2054 = vadd.f32 0.0, %v2053
  %v2055 = vpop.f32.mrb[0].mxu0
  %2056 = vmatprep.mubr.f32.mxu0 0.0
  %2057 = vmatmul.mubr.f32.gmra.mrb[0].mxu0 %v1944
  %v2058 = vpop.f32.mrb[0].mxu0
  %v2059 = vadd.f32 0.0, %v2058
  %v2060 = vpop.f32.mrb[0].mxu0
  %2061 = vmatprep.mubr.f32.mxu0 0.0
  %2062 = vmatmul.mubr.f32.gmra.mrb[0].mxu0 %v1945
  %v2063 = vpop.f32.mrb[0].mxu0
  %v2064 = vadd.f32 0.0, %v2063
  %v2065 = vpop.f32.mrb[0].mxu0
  %2066 = vmatprep.mubr.f32.mxu0 0.0
  %2067 = vmatmul.mubr.f32.gmra.mrb[0].mxu0 %v1946
  %v2068 = vpop.f32.mrb[0].mxu0
  %v2069 = vadd.f32 0.0, %v2068
  %v2070 = vpop.f32.mrb[0].mxu0
  %2071 = vmatprep.mubr.f32.mxu0 0.0
  %2072 = vmatmul.mubr.f32.gmra.mrb[0].mxu0 %v1947
  %v2073 = vpop.f32.mrb[0].mxu0
  %v2074 = vadd.f32 0.0, %v2073
  %v2075 = vpop.f32.mrb[0].mxu0
  %2076 = vmatprep.mubr.f32.mxu0 0.0
  %2077 = vmatmul.mubr.f32.gmra.mrb[0].mxu0 %v1948
  %v2078 = vpop.f32.mrb[0].mxu0
  %v2079 = vadd.f32 0.0, %v2078
  %v2080 = vpop.f32.mrb[0].mxu0
  %2081 = vmatprep.mubr.f32.mxu0 0.0
  %2082 = vmatmul.mubr.f32.gmra.mrb[0].mxu0 %v1949
  %v2083 = vpop.f32.mrb[0].mxu0
  %v2084 = vadd.f32 0.0, %v2083
  %v2085 = vpop.f32.mrb[0].mxu0
  %2086 = vmatprep.mubr.f32.mxu0 0.0
  %2087 = vmatmul.mubr.f32.gmra.mrb[0].mxu0 %v1950
  %v2088 = vpop.f32.mrb[0].mxu0
  %v2089 = vadd.f32 0.0, %v2088
  %v2090 = vpop.f32.mrb[0].mxu0
  %2091 = vmatprep.mubr.f32.mxu0 0.0
  %2092 = vmatmul.mubr.f32.gmra.mrb[0].mxu0 %v1951
  %v2093 = vpop.f32.mrb[0].mxu0
  %v2094 = vadd.f32 0.0, %v2093
  %v2095 = vpop.f32.mrb[0].mxu0
  %2096 = vmatprep.mubr.f32.mxu0 0.0
  %2097 = vmatmul.mubr.f32.gmra.mrb[0].mxu0 %v1952
  %v2098 = vpop.f32.mrb[0].mxu0
  %v2099 = vadd.f32 0.0, %v2098
  %v2100 = vpop.f32.mrb[0].mxu0
  %2101 = vmatprep.mubr.f32.mxu0 0.0
  %2102 = vmatmul.mubr.f32.gmra.mrb[0].mxu0 %v1953
  %v2103 = vpop.f32.mrb[0].mxu0
  %v2104 = vadd.f32 0.0, %v2103
  %v2105 = vpop.f32.mrb[0].mxu0
  %2106 = vmatprep.mubr.f32.mxu0 0.0
  %2107 = vmatmul.mubr.f32.gmra.mrb[0].mxu0 %v1954
  %v2108 = vpop.f32.mrb[0].mxu0
  %v2109 = vadd.f32 0.0, %v2108
  %v2110 = vpop.f32.mrb[0].mxu0
  %2111 = vmatprep.mubr.f32.mxu0 0.0
  %2112 = vmatmul.mubr.f32.gmra.mrb[0].mxu0 %v1955
  %v2113 = vpop.f32.mrb[0].mxu0
  %v2114 = vadd.f32 0.0, %v2113
  %v2115 = vpop.f32.mrb[0].mxu0
  %2116 = vdwg.mxu0
  %v2117 = vadd.f32 %v1862, %v2039
  %v2118 = vadd.f32 %v1867, %v2044
  %v2119 = vadd.f32 %v1872, %v2049
  %v2120 = vadd.f32 %v1877, %v2054
  %v2121 = vadd.f32 %v1882, %v2059
  %v2122 = vadd.f32 %v1887, %v2064
  %v2123 = vadd.f32 %v1892, %v2069
  %v2124 = vadd.f32 %v1897, %v2074
  %v2125 = vadd.f32 %v1902, %v2079
  %v2126 = vadd.f32 %v1907, %v2084
  %v2127 = vadd.f32 %v1912, %v2089
  %v2128 = vadd.f32 %v1917, %v2094
  %v2129 = vadd.f32 %v1922, %v2099
  %v2130 = vadd.f32 %v1927, %v2104
  %v2131 = vadd.f32 %v1932, %v2109
  %v2132 = vadd.f32 %v1937, %v2114
  %v2133 = vld [vmem:[#allocation2 + $0xf0] sm:$0xff]
  %v2134 = vld [vmem:[#allocation2 + $0xf8] sm:$0xff]
  %v2135 = vld [vmem:[#allocation2 + $0x100] sm:$0xff]
  %v2136 = vld [vmem:[#allocation2 + $0x108] sm:$0xff]
  %v2137 = vld [vmem:[#allocation2 + $0x110] sm:$0xff]
  %v2138 = vld [vmem:[#allocation2 + $0x118] sm:$0xff]
  %v2139 = vld [vmem:[#allocation2 + $0x120] sm:$0xff]
  %v2140 = vld [vmem:[#allocation2 + $0x128] sm:$0xff]
  %v2141 = vld [vmem:[#allocation2 + $0x130] sm:$0xff]
  %v2142 = vld [vmem:[#allocation2 + $0x138] sm:$0xff]
  %v2143 = vld [vmem:[#allocation2 + $0x140] sm:$0xff]
  %v2144 = vld [vmem:[#allocation2 + $0x148] sm:$0xff]
  %v2145 = vld [vmem:[#allocation2 + $0x150] sm:$0xff]
  %v2146 = vld [vmem:[#allocation2 + $0x158] sm:$0xff]
  %v2147 = vld [vmem:[#allocation2 + $0x160] sm:$0xff]
  %v2148 = vld [vmem:[#allocation2 + $0x168] sm:$0xff]
  %v2149 = vld [vmem:[%s1174] sm:$0xff]
  %v2150 = vld [vmem:[%s1174 + $0x8] sm:$0xff]
  %v2151 = vld [vmem:[%s1174 + $0x10] sm:$0xff]
  %v2152 = vld [vmem:[%s1174 + $0x18] sm:$0xff]
  %v2153 = vld [vmem:[%s1174 + $0x20] sm:$0xff]
  %v2154 = vld [vmem:[%s1174 + $0x28] sm:$0xff]
  %v2155 = vld [vmem:[%s1174 + $0x30] sm:$0xff]
  %v2156 = vld [vmem:[%s1174 + $0x38] sm:$0xff]
  %v2157 = vld [vmem:[%s1174 + $0x40] sm:$0xff]
  %v2158 = vld [vmem:[%s1174 + $0x48] sm:$0xff]
  %v2159 = vld [vmem:[%s1174 + $0x50] sm:$0xff]
  %v2160 = vld [vmem:[%s1174 + $0x58] sm:$0xff]
  %v2161 = vld [vmem:[%s1174 + $0x60] sm:$0xff]
  %v2162 = vld [vmem:[%s1174 + $0x68] sm:$0xff]
  %v2163 = vld [vmem:[%s1174 + $0x70] sm:$0xff]
  %v2164 = vld [vmem:[%s1174 + $0x78] sm:$0xff]
  %2165 = vmatprep.subr.mxu0 0.0
  %2166 = vmatpush1.msra.mxu0 %v2149
  %2167 = vmatprep.subr.mxu0 0.0
  %2168 = vmatpush1.msra.mxu0 %v2150
  %2169 = vmatprep.subr.mxu0 0.0
  %2170 = vmatpush1.msra.mxu0 %v2151
  %2171 = vmatprep.subr.mxu0 0.0
  %2172 = vmatpush1.msra.mxu0 %v2152
  %2173 = vmatprep.subr.mxu0 0.0
  %2174 = vmatpush1.msra.mxu0 %v2153
  %2175 = vmatprep.subr.mxu0 0.0
  %2176 = vmatpush1.msra.mxu0 %v2154
  %2177 = vmatprep.subr.mxu0 0.0
  %2178 = vmatpush1.msra.mxu0 %v2155
  %2179 = vmatprep.subr.mxu0 0.0
  %2180 = vmatpush1.msra.mxu0 %v2156
  %2181 = vmatprep.subr.mxu0 0.0
  %2182 = vmatpush1.msra.mxu0 %v2157
  %2183 = vmatprep.subr.mxu0 0.0
  %2184 = vmatpush1.msra.mxu0 %v2158
  %2185 = vmatprep.subr.mxu0 0.0
  %2186 = vmatpush1.msra.mxu0 %v2159
  %2187 = vmatprep.subr.mxu0 0.0
  %2188 = vmatpush1.msra.mxu0 %v2160
  %2189 = vmatprep.subr.mxu0 0.0
  %2190 = vmatpush1.msra.mxu0 %v2161
  %2191 = vmatprep.subr.mxu0 0.0
  %2192 = vmatpush1.msra.mxu0 %v2162
  %2193 = vmatprep.subr.mxu0 0.0
  %2194 = vmatpush1.msra.mxu0 %v2163
  %2195 = vmatprep.subr.mxu0 0.0
  %2196 = vmatpush1.msra.mxu0 %v2164
  %2197 = vmatprep.subr.mxu0 0.0
  %2198 = vmatpush1.msra.mxu0 0.0
  %2199 = vmatprep.subr.mxu0 0.0
  %2200 = vmatpush1.msra.mxu0 0.0
  %2201 = vmatprep.subr.mxu0 0.0
  %2202 = vmatpush1.msra.mxu0 0.0
  %2203 = vmatprep.subr.mxu0 0.0
  %2204 = vmatpush1.msra.mxu0 0.0
  %2205 = vmatprep.subr.mxu0 0.0
  %2206 = vmatpush1.msra.mxu0 0.0
  %2207 = vmatprep.subr.mxu0 0.0
  %2208 = vmatpush1.msra.mxu0 0.0
  %2209 = vmatprep.subr.mxu0 0.0
  %2210 = vmatpush1.msra.mxu0 0.0
  %2211 = vmatprep.subr.mxu0 0.0
  %2212 = vmatpush1.msra.mxu0 0.0
  %2213 = vmatprep.subr.mxu0 0.0
  %2214 = vmatpush1.msra.mxu0 0.0
  %2215 = vmatprep.subr.mxu0 0.0
  %2216 = vmatpush1.msra.mxu0 0.0
  %2217 = vmatprep.subr.mxu0 0.0
  %2218 = vmatpush1.msra.mxu0 0.0
  %2219 = vmatprep.subr.mxu0 0.0
  %2220 = vmatpush1.msra.mxu0 0.0
  %2221 = vmatprep.subr.mxu0 0.0
  %2222 = vmatpush1.msra.mxu0 0.0
  %2223 = vmatprep.subr.mxu0 0.0
  %2224 = vmatpush1.msra.mxu0 0.0
  %2225 = vmatprep.subr.mxu0 0.0
  %2226 = vmatpush1.msra.mxu0 0.0
  %2227 = vmatprep.subr.mxu0 0.0
  %2228 = vmatpush1.msra.mxu0 0.0
  %2229 = vmatprep.mubr.f32.mxu0 0.0
  %2230 = vmatmul.mubr.f32.gmra.mrb[0].mxu0 %v2133
  %v2231 = vpop.f32.mrb[0].mxu0
  %v2232 = vadd.f32 0.0, %v2231
  %v2233 = vpop.f32.mrb[0].mxu0
  %2234 = vmatprep.mubr.f32.mxu0 0.0
  %2235 = vmatmul.mubr.f32.gmra.mrb[0].mxu0 %v2134
  %v2236 = vpop.f32.mrb[0].mxu0
  %v2237 = vadd.f32 0.0, %v2236
  %v2238 = vpop.f32.mrb[0].mxu0
  %2239 = vmatprep.mubr.f32.mxu0 0.0
  %2240 = vmatmul.mubr.f32.gmra.mrb[0].mxu0 %v2135
  %v2241 = vpop.f32.mrb[0].mxu0
  %v2242 = vadd.f32 0.0, %v2241
  %v2243 = vpop.f32.mrb[0].mxu0
  %2244 = vmatprep.mubr.f32.mxu0 0.0
  %2245 = vmatmul.mubr.f32.gmra.mrb[0].mxu0 %v2136
  %v2246 = vpop.f32.mrb[0].mxu0
  %v2247 = vadd.f32 0.0, %v2246
  %v2248 = vpop.f32.mrb[0].mxu0
  %2249 = vmatprep.mubr.f32.mxu0 0.0
  %2250 = vmatmul.mubr.f32.gmra.mrb[0].mxu0 %v2137
  %v2251 = vpop.f32.mrb[0].mxu0
  %v2252 = vadd.f32 0.0, %v2251
  %v2253 = vpop.f32.mrb[0].mxu0
  %2254 = vmatprep.mubr.f32.mxu0 0.0
  %2255 = vmatmul.mubr.f32.gmra.mrb[0].mxu0 %v2138
  %v2256 = vpop.f32.mrb[0].mxu0
  %v2257 = vadd.f32 0.0, %v2256
  %v2258 = vpop.f32.mrb[0].mxu0
  %2259 = vmatprep.mubr.f32.mxu0 0.0
  %2260 = vmatmul.mubr.f32.gmra.mrb[0].mxu0 %v2139
  %v2261 = vpop.f32.mrb[0].mxu0
  %v2262 = vadd.f32 0.0, %v2261
  %v2263 = vpop.f32.mrb[0].mxu0
  %2264 = vmatprep.mubr.f32.mxu0 0.0
  %2265 = vmatmul.mubr.f32.gmra.mrb[0].mxu0 %v2140
  %v2266 = vpop.f32.mrb[0].mxu0
  %v2267 = vadd.f32 0.0, %v2266
  %v2268 = vpop.f32.mrb[0].mxu0
  %2269 = vmatprep.mubr.f32.mxu0 0.0
  %2270 = vmatmul.mubr.f32.gmra.mrb[0].mxu0 %v2141
  %v2271 = vpop.f32.mrb[0].mxu0
  %v2272 = vadd.f32 0.0, %v2271
  %v2273 = vpop.f32.mrb[0].mxu0
  %2274 = vmatprep.mubr.f32.mxu0 0.0
  %2275 = vmatmul.mubr.f32.gmra.mrb[0].mxu0 %v2142
  %v2276 = vpop.f32.mrb[0].mxu0
  %v2277 = vadd.f32 0.0, %v2276
  %v2278 = vpop.f32.mrb[0].mxu0
  %2279 = vmatprep.mubr.f32.mxu0 0.0
  %2280 = vmatmul.mubr.f32.gmra.mrb[0].mxu0 %v2143
  %v2281 = vpop.f32.mrb[0].mxu0
  %v2282 = vadd.f32 0.0, %v2281
  %v2283 = vpop.f32.mrb[0].mxu0
  %2284 = vmatprep.mubr.f32.mxu0 0.0
  %2285 = vmatmul.mubr.f32.gmra.mrb[0].mxu0 %v2144
  %v2286 = vpop.f32.mrb[0].mxu0
  %v2287 = vadd.f32 0.0, %v2286
  %v2288 = vpop.f32.mrb[0].mxu0
  %2289 = vmatprep.mubr.f32.mxu0 0.0
  %2290 = vmatmul.mubr.f32.gmra.mrb[0].mxu0 %v2145
  %v2291 = vpop.f32.mrb[0].mxu0
  %v2292 = vadd.f32 0.0, %v2291
  %v2293 = vpop.f32.mrb[0].mxu0
  %2294 = vmatprep.mubr.f32.mxu0 0.0
  %2295 = vmatmul.mubr.f32.gmra.mrb[0].mxu0 %v2146
  %v2296 = vpop.f32.mrb[0].mxu0
  %v2297 = vadd.f32 0.0, %v2296
  %v2298 = vpop.f32.mrb[0].mxu0
  %2299 = vmatprep.mubr.f32.mxu0 0.0
  %2300 = vmatmul.mubr.f32.gmra.mrb[0].mxu0 %v2147
  %v2301 = vpop.f32.mrb[0].mxu0
  %v2302 = vadd.f32 0.0, %v2301
  %v2303 = vpop.f32.mrb[0].mxu0
  %2304 = vmatprep.mubr.f32.mxu0 0.0
  %2305 = vmatmul.mubr.f32.gmra.mrb[0].mxu0 %v2148
  %v2306 = vpop.f32.mrb[0].mxu0
  %v2307 = vadd.f32 0.0, %v2306
  %v2308 = vpop.f32.mrb[0].mxu0
  %2309 = vdwg.mxu0
  %v2310 = vadd.f32 %v2117, %v2232
  %v2311 = vadd.f32 %v2118, %v2237
  %v2312 = vadd.f32 %v2119, %v2242
  %v2313 = vadd.f32 %v2120, %v2247
  %v2314 = vadd.f32 %v2121, %v2252
  %v2315 = vadd.f32 %v2122, %v2257
  %v2316 = vadd.f32 %v2123, %v2262
  %v2317 = vadd.f32 %v2124, %v2267
  %v2318 = vadd.f32 %v2125, %v2272
  %v2319 = vadd.f32 %v2126, %v2277
  %v2320 = vadd.f32 %v2127, %v2282
  %v2321 = vadd.f32 %v2128, %v2287
  %v2322 = vadd.f32 %v2129, %v2292
  %v2323 = vadd.f32 %v2130, %v2297
  %v2324 = vadd.f32 %v2131, %v2302
  %v2325 = vadd.f32 %v2132, %v2307
  %v2326 = vld [vmem:[#allocation2 + $0x100] sm:$0xff]
  %v2327 = vld [vmem:[#allocation2 + $0x108] sm:$0xff]
  %v2328 = vld [vmem:[#allocation2 + $0x110] sm:$0xff]
  %v2329 = vld [vmem:[#allocation2 + $0x118] sm:$0xff]
  %v2330 = vld [vmem:[#allocation2 + $0x120] sm:$0xff]
  %v2331 = vld [vmem:[#allocation2 + $0x128] sm:$0xff]
  %v2332 = vld [vmem:[#allocation2 + $0x130] sm:$0xff]
  %v2333 = vld [vmem:[#allocation2 + $0x138] sm:$0xff]
  %v2334 = vld [vmem:[#allocation2 + $0x140] sm:$0xff]
  %v2335 = vld [vmem:[#allocation2 + $0x148] sm:$0xff]
  %v2336 = vld [vmem:[#allocation2 + $0x150] sm:$0xff]
  %v2337 = vld [vmem:[#allocation2 + $0x158] sm:$0xff]
  %v2338 = vld [vmem:[#allocation2 + $0x160] sm:$0xff]
  %v2339 = vld [vmem:[#allocation2 + $0x168] sm:$0xff]
  %v2340 = vld [vmem:[#allocation2 + $0x170] sm:$0xff]
  %v2341 = vld [vmem:[#allocation2 + $0x178] sm:$0xff]
  %v2342 = vld [vmem:[%s1368] sm:$0xff]
  %v2343 = vld [vmem:[%s1368 + $0x8] sm:$0xff]
  %v2344 = vld [vmem:[%s1368 + $0x10] sm:$0xff]
  %v2345 = vld [vmem:[%s1368 + $0x18] sm:$0xff]
  %v2346 = vld [vmem:[%s1368 + $0x20] sm:$0xff]
  %v2347 = vld [vmem:[%s1368 + $0x28] sm:$0xff]
  %v2348 = vld [vmem:[%s1368 + $0x30] sm:$0xff]
  %v2349 = vld [vmem:[%s1368 + $0x38] sm:$0xff]
  %v2350 = vld [vmem:[%s1368 + $0x40] sm:$0xff]
  %v2351 = vld [vmem:[%s1368 + $0x48] sm:$0xff]
  %v2352 = vld [vmem:[%s1368 + $0x50] sm:$0xff]
  %v2353 = vld [vmem:[%s1368 + $0x58] sm:$0xff]
  %v2354 = vld [vmem:[%s1368 + $0x60] sm:$0xff]
  %v2355 = vld [vmem:[%s1368 + $0x68] sm:$0xff]
  %v2356 = vld [vmem:[%s1368 + $0x70] sm:$0xff]
  %v2357 = vld [vmem:[%s1368 + $0x78] sm:$0xff]
  %2358 = vmatprep.subr.mxu0 0.0
  %2359 = vmatpush1.msra.mxu0 %v2342
  %2360 = vmatprep.subr.mxu0 0.0
  %2361 = vmatpush1.msra.mxu0 %v2343
  %2362 = vmatprep.subr.mxu0 0.0
  %2363 = vmatpush1.msra.mxu0 %v2344
  %2364 = vmatprep.subr.mxu0 0.0
  %2365 = vmatpush1.msra.mxu0 %v2345
  %2366 = vmatprep.subr.mxu0 0.0
  %2367 = vmatpush1.msra.mxu0 %v2346
  %2368 = vmatprep.subr.mxu0 0.0
  %2369 = vmatpush1.msra.mxu0 %v2347
  %2370 = vmatprep.subr.mxu0 0.0
  %2371 = vmatpush1.msra.mxu0 %v2348
  %2372 = vmatprep.subr.mxu0 0.0
  %2373 = vmatpush1.msra.mxu0 %v2349
  %2374 = vmatprep.subr.mxu0 0.0
  %2375 = vmatpush1.msra.mxu0 %v2350
  %2376 = vmatprep.subr.mxu0 0.0
  %2377 = vmatpush1.msra.mxu0 %v2351
  %2378 = vmatprep.subr.mxu0 0.0
  %2379 = vmatpush1.msra.mxu0 %v2352
  %2380 = vmatprep.subr.mxu0 0.0
  %2381 = vmatpush1.msra.mxu0 %v2353
  %2382 = vmatprep.subr.mxu0 0.0
  %2383 = vmatpush1.msra.mxu0 %v2354
  %2384 = vmatprep.subr.mxu0 0.0
  %2385 = vmatpush1.msra.mxu0 %v2355
  %2386 = vmatprep.subr.mxu0 0.0
  %2387 = vmatpush1.msra.mxu0 %v2356
  %2388 = vmatprep.subr.mxu0 0.0
  %2389 = vmatpush1.msra.mxu0 %v2357
  %2390 = vmatprep.subr.mxu0 0.0
  %2391 = vmatpush1.msra.mxu0 0.0
  %2392 = vmatprep.subr.mxu0 0.0
  %2393 = vmatpush1.msra.mxu0 0.0
  %2394 = vmatprep.subr.mxu0 0.0
  %2395 = vmatpush1.msra.mxu0 0.0
  %2396 = vmatprep.subr.mxu0 0.0
  %2397 = vmatpush1.msra.mxu0 0.0
  %2398 = vmatprep.subr.mxu0 0.0
  %2399 = vmatpush1.msra.mxu0 0.0
  %2400 = vmatprep.subr.mxu0 0.0
  %2401 = vmatpush1.msra.mxu0 0.0
  %2402 = vmatprep.subr.mxu0 0.0
  %2403 = vmatpush1.msra.mxu0 0.0
  %2404 = vmatprep.subr.mxu0 0.0
  %2405 = vmatpush1.msra.mxu0 0.0
  %2406 = vmatprep.subr.mxu0 0.0
  %2407 = vmatpush1.msra.mxu0 0.0
  %2408 = vmatprep.subr.mxu0 0.0
  %2409 = vmatpush1.msra.mxu0 0.0
  %2410 = vmatprep.subr.mxu0 0.0
  %2411 = vmatpush1.msra.mxu0 0.0
  %2412 = vmatprep.subr.mxu0 0.0
  %2413 = vmatpush1.msra.mxu0 0.0
  %2414 = vmatprep.subr.mxu0 0.0
  %2415 = vmatpush1.msra.mxu0 0.0
  %2416 = vmatprep.subr.mxu0 0.0
  %2417 = vmatpush1.msra.mxu0 0.0
  %2418 = vmatprep.subr.mxu0 0.0
  %2419 = vmatpush1.msra.mxu0 0.0
  %2420 = vmatprep.subr.mxu0 0.0
  %2421 = vmatpush1.msra.mxu0 0.0
  %2422 = vmatprep.mubr.f32.mxu0 0.0
  %2423 = vmatmul.mubr.f32.gmra.mrb[0].mxu0 %v2326
  %v2424 = vpop.f32.mrb[0].mxu0
  %v2425 = vadd.f32 0.0, %v2424
  %v2426 = vpop.f32.mrb[0].mxu0
  %2427 = vmatprep.mubr.f32.mxu0 0.0
  %2428 = vmatmul.mubr.f32.gmra.mrb[0].mxu0 %v2327
  %v2429 = vpop.f32.mrb[0].mxu0
  %v2430 = vadd.f32 0.0, %v2429
  %v2431 = vpop.f32.mrb[0].mxu0
  %2432 = vmatprep.mubr.f32.mxu0 0.0
  %2433 = vmatmul.mubr.f32.gmra.mrb[0].mxu0 %v2328
  %v2434 = vpop.f32.mrb[0].mxu0
  %v2435 = vadd.f32 0.0, %v2434
  %v2436 = vpop.f32.mrb[0].mxu0
  %2437 = vmatprep.mubr.f32.mxu0 0.0
  %2438 = vmatmul.mubr.f32.gmra.mrb[0].mxu0 %v2329
  %v2439 = vpop.f32.mrb[0].mxu0
  %v2440 = vadd.f32 0.0, %v2439
  %v2441 = vpop.f32.mrb[0].mxu0
  %2442 = vmatprep.mubr.f32.mxu0 0.0
  %2443 = vmatmul.mubr.f32.gmra.mrb[0].mxu0 %v2330
  %v2444 = vpop.f32.mrb[0].mxu0
  %v2445 = vadd.f32 0.0, %v2444
  %v2446 = vpop.f32.mrb[0].mxu0
  %2447 = vmatprep.mubr.f32.mxu0 0.0
  %2448 = vmatmul.mubr.f32.gmra.mrb[0].mxu0 %v2331
  %v2449 = vpop.f32.mrb[0].mxu0
  %v2450 = vadd.f32 0.0, %v2449
  %v2451 = vpop.f32.mrb[0].mxu0
  %2452 = vmatprep.mubr.f32.mxu0 0.0
  %2453 = vmatmul.mubr.f32.gmra.mrb[0].mxu0 %v2332
  %v2454 = vpop.f32.mrb[0].mxu0
  %v2455 = vadd.f32 0.0, %v2454
  %v2456 = vpop.f32.mrb[0].mxu0
  %2457 = vmatprep.mubr.f32.mxu0 0.0
  %2458 = vmatmul.mubr.f32.gmra.mrb[0].mxu0 %v2333
  %v2459 = vpop.f32.mrb[0].mxu0
  %v2460 = vadd.f32 0.0, %v2459
  %v2461 = vpop.f32.mrb[0].mxu0
  %2462 = vmatprep.mubr.f32.mxu0 0.0
  %2463 = vmatmul.mubr.f32.gmra.mrb[0].mxu0 %v2334
  %v2464 = vpop.f32.mrb[0].mxu0
  %v2465 = vadd.f32 0.0, %v2464
  %v2466 = vpop.f32.mrb[0].mxu0
  %2467 = vmatprep.mubr.f32.mxu0 0.0
  %2468 = vmatmul.mubr.f32.gmra.mrb[0].mxu0 %v2335
  %v2469 = vpop.f32.mrb[0].mxu0
  %v2470 = vadd.f32 0.0, %v2469
  %v2471 = vpop.f32.mrb[0].mxu0
  %2472 = vmatprep.mubr.f32.mxu0 0.0
  %2473 = vmatmul.mubr.f32.gmra.mrb[0].mxu0 %v2336
  %v2474 = vpop.f32.mrb[0].mxu0
  %v2475 = vadd.f32 0.0, %v2474
  %v2476 = vpop.f32.mrb[0].mxu0
  %2477 = vmatprep.mubr.f32.mxu0 0.0
  %2478 = vmatmul.mubr.f32.gmra.mrb[0].mxu0 %v2337
  %v2479 = vpop.f32.mrb[0].mxu0
  %v2480 = vadd.f32 0.0, %v2479
  %v2481 = vpop.f32.mrb[0].mxu0
  %2482 = vmatprep.mubr.f32.mxu0 0.0
  %2483 = vmatmul.mubr.f32.gmra.mrb[0].mxu0 %v2338
  %v2484 = vpop.f32.mrb[0].mxu0
  %v2485 = vadd.f32 0.0, %v2484
  %v2486 = vpop.f32.mrb[0].mxu0
  %2487 = vmatprep.mubr.f32.mxu0 0.0
  %2488 = vmatmul.mubr.f32.gmra.mrb[0].mxu0 %v2339
  %v2489 = vpop.f32.mrb[0].mxu0
  %v2490 = vadd.f32 0.0, %v2489
  %v2491 = vpop.f32.mrb[0].mxu0
  %2492 = vmatprep.mubr.f32.mxu0 0.0
  %2493 = vmatmul.mubr.f32.gmra.mrb[0].mxu0 %v2340
  %v2494 = vpop.f32.mrb[0].mxu0
  %v2495 = vadd.f32 0.0, %v2494
  %v2496 = vpop.f32.mrb[0].mxu0
  %2497 = vmatprep.mubr.f32.mxu0 0.0
  %2498 = vmatmul.mubr.f32.gmra.mrb[0].mxu0 %v2341
  %v2499 = vpop.f32.mrb[0].mxu0
  %v2500 = vadd.f32 0.0, %v2499
  %v2501 = vpop.f32.mrb[0].mxu0
  %2502 = vdwg.mxu0
  %v2503 = vadd.f32 %v2310, %v2425
  %v2504 = vadd.f32 %v2311, %v2430
  %v2505 = vadd.f32 %v2312, %v2435
  %v2506 = vadd.f32 %v2313, %v2440
  %v2507 = vadd.f32 %v2314, %v2445
  %v2508 = vadd.f32 %v2315, %v2450
  %v2509 = vadd.f32 %v2316, %v2455
  %v2510 = vadd.f32 %v2317, %v2460
  %v2511 = vadd.f32 %v2318, %v2465
  %v2512 = vadd.f32 %v2319, %v2470
  %v2513 = vadd.f32 %v2320, %v2475
  %v2514 = vadd.f32 %v2321, %v2480
  %v2515 = vadd.f32 %v2322, %v2485
  %v2516 = vadd.f32 %v2323, %v2490
  %v2517 = vadd.f32 %v2324, %v2495
  %v2518 = vadd.f32 %v2325, %v2500
  %v2519 = vadd.f32 %v2503, %v1550
  %v2520 = vadd.f32 %v2504, %v1550
  %v2521 = vadd.f32 %v2505, %v1550
  %v2522 = vadd.f32 %v2506, %v1550
  %v2523 = vadd.f32 %v2507, %v1550
  %v2524 = vadd.f32 %v2508, %v1550
  %v2525 = vadd.f32 %v2509, %v1550
  %v2526 = vadd.f32 %v2510, %v1550
  %v2527 = vadd.f32 %v2511, %v1550
  %v2528 = vadd.f32 %v2512, %v1550
  %v2529 = vadd.f32 %v2513, %v1550
  %v2530 = vadd.f32 %v2514, %v1550
  %v2531 = vadd.f32 %v2515, %v1550
  %v2532 = vadd.f32 %v2516, %v1550
  %v2533 = vadd.f32 %v2517, %v1550
  %v2534 = vadd.f32 %v2518, %v1550
  %v2535 = vmax.f32 %v2519, 0.0
  %v2536 = vmax.f32 %v2520, 0.0
  %v2537 = vmax.f32 %v2521, 0.0
  %v2538 = vmax.f32 %v2522, 0.0
  %v2539 = vmax.f32 %v2523, 0.0
  %v2540 = vmax.f32 %v2524, 0.0
  %v2541 = vmax.f32 %v2525, 0.0
  %v2542 = vmax.f32 %v2526, 0.0
  %v2543 = vmax.f32 %v2527, 0.0
  %v2544 = vmax.f32 %v2528, 0.0
  %v2545 = vmax.f32 %v2529, 0.0
  %v2546 = vmax.f32 %v2530, 0.0
  %v2547 = vmax.f32 %v2531, 0.0
  %v2548 = vmax.f32 %v2532, 0.0
  %v2549 = vmax.f32 %v2533, 0.0
  %v2550 = vmax.f32 %v2534, 0.0
  %2551 = vst [vmem:[%s5 + $0x80] sm:$0xff] %v2535
  %2552 = vst [vmem:[%s5 + $0x88] sm:$0xff] %v2536
  %2553 = vst [vmem:[%s5 + $0x90] sm:$0xff] %v2537
  %2554 = vst [vmem:[%s5 + $0x98] sm:$0xff] %v2538
  %2555 = vst [vmem:[%s5 + $0xa0] sm:$0xff] %v2539
  %2556 = vst [vmem:[%s5 + $0xa8] sm:$0xff] %v2540
  %2557 = vst [vmem:[%s5 + $0xb0] sm:$0xff] %v2541
  %2558 = vst [vmem:[%s5 + $0xb8] sm:$0xff] %v2542
  %2559 = vst [vmem:[%s5 + $0xc0] sm:$0xff] %v2543
  %2560 = vst [vmem:[%s5 + $0xc8] sm:$0xff] %v2544
  %2561 = vst [vmem:[%s5 + $0xd0] sm:$0xff] %v2545
  %2562 = vst [vmem:[%s5 + $0xd8] sm:$0xff] %v2546
  %2563 = vst [vmem:[%s5 + $0xe0] sm:$0xff] %v2547
  %2564 = vst [vmem:[%s5 + $0xe8] sm:$0xff] %v2548
  %2565 = vst [vmem:[%s5 + $0xf0] sm:$0xff] %v2549
  %2566 = vst [vmem:[%s5 + $0xf8] sm:$0xff] %v2550
  // Predicated region
  $region22: #{model_forward.1} parent=0 // pred_check
    _
  $region23: #{model_forward.1} parent=0 // pred_check_branch
    %2568 = sbr.rel (0) target = $region25
  $region24: #{model_forward.1} parent=0 // pred_region
    _
  $region25: #{model_forward.1} parent=0 // pred_fallthru
    _
  // Predicated region
  $region26: #{model_forward.1} parent=0 // pred_check
    _
  $region27: #{model_forward.1} parent=0 // pred_check_branch
    %2570 = sbr.rel (0) target = $region29
  $region28: #{model_forward.1} parent=0 // pred_region
    _
  $region29: #{model_forward.1} parent=0 // pred_fallthru
    _

</llo_original>
